<compile_context>
chip_gen: v7x
topology: tpu7x:2x2x1
jax: 0.10.0
libtpu: 0.0.40
codegen_flags: <defaults>
</compile_context>

<pallas_src>
import math

import jax
import jax.numpy as jnp
from jax.experimental import pallas as pl

# ---------------- model config (small, consistent with the module) -----------
B = 2            # batch
S = 8            # sequence length
H = 32           # hidden_size
NUM_HEADS = 4    # num_attention_heads
DH = H // NUM_HEADS
I = 64           # intermediate_size
LN_EPS = 1e-12

LANE = 128       # TPU lane width; matmul N dims / packed slabs are padded to this
ROWS = B * S

# Set to jnp.bfloat16 on v6e/v7x at real BERT sizes for MXU throughput (keep
# preferred_element_type=f32 accumulation).  f32 here for exact torch parity.
COMPUTE_DTYPE = jnp.float32
# Flag-gated tanh-approx GELU (goes to the EUP slot, frees VALU on v6e at real
# sizes).  Default erf-exact matches torch.erf of the reference module.
USE_TANH_GELU = False


def _layer_norm(x, gamma, beta, eps=LN_EPS):
    # PyTorch LayerNorm: biased variance over last dim.
    mu = jnp.mean(x, axis=-1, keepdims=True)
    xc = x - mu
    var = jnp.mean(xc * xc, axis=-1, keepdims=True)
    return xc * jax.lax.rsqrt(var + eps) * gamma + beta


def _gelu(x):
    if USE_TANH_GELU:
        return 0.5 * x * (1.0 + jnp.tanh(math.sqrt(2.0 / math.pi)
                                         * (x + 0.044715 * x * x * x)))
    # exact erf GELU — matches torch.erf semantics of the reference module
    return x * 0.5 * (1.0 + jax.lax.erf(x * (1.0 / math.sqrt(2.0))))


def _c(t):
    return t.astype(COMPUTE_DTYPE)


def bert_layer_kernel(x_ref, mask_ref, wqkv_ref, wo_ref, wi_ref, w2_ref,
                      vec_ref, out_ref):
    x = x_ref[...]           # (ROWS, H) f32
    mask = mask_ref[...]     # (B, 1, S) additive mask
    vec = vec_ref[...]       # (8, LANE) packed small vectors (zero padded)

    bqkv = vec[0:1, :]       # (1, LANE): [bq/sqrt(DH) | bk | bv | 0...]
    bo = vec[1:2, 0:H]
    g1 = vec[2:3, 0:H]
    be1 = vec[3:4, 0:H]
    bi = vec[4:5, :]         # (1, LANE): [bi | 0...] (matches padded wi)
    b2 = vec[5:6, 0:H]
    g2 = vec[6:7, 0:H]
    be2 = vec[7:8, 0:H]

    # --- BertSelfAttention: fused, lane-dense QKV projection (one MXU push) --
    qkv = jnp.dot(_c(x), _c(wqkv_ref[...]),
                  preferred_element_type=jnp.float32) + bqkv     # (ROWS, LANE)

    # Split heads into the LEADING batch dim (head-major, then batch).  Only
    # static lane slices + leading-dim reshapes + a leading-axis stack: cheap
    # and robustly lowerable.  q is pre-scaled by 1/sqrt(DH) via the weights.
    def split_heads(base):
        slabs = [qkv[:, base + h * DH: base + (h + 1) * DH].reshape(B, S, DH)
                 for h in range(NUM_HEADS)]
        return jnp.stack(slabs, axis=0).reshape(NUM_HEADS * B, S, DH)

    qh = split_heads(0)          # (NH*B, S, DH)
    kh = split_heads(H)
    vh = split_heads(2 * H)

    # One head-batched score einsum / softmax / context einsum (single streams).
    scores = jnp.einsum('bqd,bkd->bqk', _c(qh), _c(kh),
                        preferred_element_type=jnp.float32)       # (NH*B, S, S)
    scores = (scores.reshape(NUM_HEADS, B, S, S)
              + mask[None, :, :, :]).reshape(NUM_HEADS * B, S, S)

    m = jnp.max(scores, axis=-1, keepdims=True)
    e = jnp.exp(scores - m)
    denom = jnp.sum(e, axis=-1, keepdims=True)
    probs = e / denom            # exact divide for torch softmax parity
    # attention dropout is identity in eval mode

    ctx = jnp.einsum('bqk,bkd->bqd', _c(probs), _c(vh),
                     preferred_element_type=jnp.float32)          # (NH*B, S, DH)

    # Output projection: one head-batched einsum against wo (NH, DH, H), then a
    # leading-axis reduce — replaces 4 dots + 4 accumulator adds.
    ctx = ctx.reshape(NUM_HEADS, B * S, DH)                        # leading-dim only
    attn_heads = jnp.einsum('hrd,hdo->hro', _c(ctx), _c(wo_ref[...]),
                            preferred_element_type=jnp.float32)    # (NH, ROWS, H)
    attn_pre = jnp.sum(attn_heads, axis=0)                         # (ROWS, H)

    # --- BertSelfOutput: dense bias + residual + LayerNorm -------------------
    attn_out = _layer_norm(attn_pre + bo + x, g1, be1)

    # --- BertIntermediate: dense (lane-dense 128-wide) + gelu ----------------
    inter = jnp.dot(_c(attn_out), _c(wi_ref[...]),
                    preferred_element_type=jnp.float32) + bi       # (ROWS, LANE)
    inter = _gelu(inter)

    # --- BertOutput: dense + residual + LayerNorm ----------------------------
    out2 = jnp.dot(_c(inter), _c(w2_ref[...]),
                   preferred_element_type=jnp.float32) + b2        # (ROWS, H)
    out_ref[...] = _layer_norm(out2 + attn_out, g2, be2)


def pack_params(params):
    """One-time parameter layout packing (hoisted out of the per-call path).

    Linear weights are stored as (in, out) — transpose first if importing a
    PyTorch state_dict (nn.Linear stores (out, in)).
    """
    inv_sqrt_dh = 1.0 / math.sqrt(DH)
    wq = params["wq"] * inv_sqrt_dh          # fold the score scale into Wq/bq
    bq = params["bq"] * inv_sqrt_dh

    wqkv = jnp.concatenate([wq, params["wk"], params["wv"]], axis=1)   # (H, 3H)
    wqkv = jnp.pad(wqkv, ((0, 0), (0, LANE - 3 * H)))                  # (H, 128)
    bqkv = jnp.concatenate([bq, params["bk"], params["bv"]], axis=1)   # (1, 3H)

    wo_heads = params["wo"].reshape(NUM_HEADS, DH, H)                  # (NH, DH, H)
    wi = jnp.pad(params["wi"], ((0, 0), (0, LANE - I)))                # (H, 128)
    w2 = jnp.pad(params["w2"], ((0, LANE - I), (0, 0)))                # (128, H)

    def _row(v):   # pad a (1, n) vector to a (1, LANE) row
        return jnp.pad(v, ((0, 0), (0, LANE - v.shape[1])))

    vec = jnp.concatenate([
        _row(bqkv), _row(params["bo"]), _row(params["g1"]), _row(params["be1"]),
        _row(params["bi"]), _row(params["b2"]), _row(params["g2"]), _row(params["be2"]),
    ], axis=0)                                                          # (8, 128)

    return {"wqkv": wqkv, "wo": wo_heads, "wi": wi, "w2": w2, "vec": vec}


def bert_layer(hidden_states, attention_mask, packed):
    """hidden_states: (B, S, H) f32; attention_mask: (B, 1, S) additive f32."""
    Bn, Sn, Hn = hidden_states.shape
    rows = Bn * Sn
    x2d = hidden_states.reshape(rows, Hn)

    args = (x2d, attention_mask, packed["wqkv"], packed["wo"],
            packed["wi"], packed["w2"], packed["vec"])

    flops = (2 * rows * Hn * (3 * Hn)            # QKV
             + 2 * 2 * Bn * Sn * Sn * Hn         # scores + context
             + 2 * rows * Hn * Hn                # output projection
             + 2 * rows * Hn * I                 # intermediate
             + 2 * rows * I * Hn)                # output dense
    transcendentals = NUM_HEADS * Bn * Sn * Sn + rows * I + 2 * rows
    bytes_accessed = (sum(int(a.size) * a.dtype.itemsize for a in args)
                      + rows * Hn * 4)

    # Whole (B*S, H) slab in one grid-less invocation: at these toy shapes the
    # kernel is per-call-overhead bound; a grid would only add ~0.35 us/step.
    # (Real sizes: add a "parallel" row grid axis + K-tiled MLP, see header.)
    out2d = pl.pallas_call(
        bert_layer_kernel,
        out_shape=jax.ShapeDtypeStruct((rows, Hn), jnp.float32),
        cost_estimate=pl.CostEstimate(
            flops=flops,
            transcendentals=transcendentals,
            bytes_accessed=bytes_accessed,
        ),
    )(*args)
    return out2d.reshape(Bn, Sn, Hn)


def bert_layer_reference(hidden_states, attention_mask, params):
    """Pure-JAX reference mirroring the torch BertLayer forward (eval mode)."""
    hp = jax.lax.Precision.HIGHEST
    x = hidden_states                                   # (B, S, H)
    q = jnp.dot(x, params["wq"], precision=hp) + params["bq"]
    k = jnp.dot(x, params["wk"], precision=hp) + params["bk"]
    v = jnp.dot(x, params["wv"], precision=hp) + params["bv"]

    def split(t):                                        # (B,S,H) -> (B,NH,S,DH)
        return t.reshape(B, S, NUM_HEADS, DH).transpose(0, 2, 1, 3)

    qh, kh, vh = split(q), split(k), split(v)
    scores = jnp.einsum('bhqd,bhkd->bhqk', qh, kh, precision=hp) / math.sqrt(DH)
    scores = scores + attention_mask[:, None, :, :]      # (B,1,1,S)
    probs = jax.nn.softmax(scores, axis=-1)
    ctx = jnp.einsum('bhqk,bhkd->bhqd', probs, vh, precision=hp)
    ctx = ctx.transpose(0, 2, 1, 3).reshape(B, S, H)
    attn = jnp.dot(ctx, params["wo"], precision=hp) + params["bo"]
    attn = _layer_norm(attn + x, params["g1"], params["be1"])
    inter = jnp.dot(attn, params["wi"], precision=hp) + params["bi"]
    inter = inter * 0.5 * (1.0 + jax.lax.erf(inter / math.sqrt(2.0)))
    out = jnp.dot(inter, params["w2"], precision=hp) + params["b2"]
    return _layer_norm(out + attn, params["g2"], params["be2"])


def init_params(key):
    """Deterministic synthetic parameters. Linear weights stored as (in, out)."""
    ks = jax.random.split(key, 8)
    std = 0.02
    return {
        "wq": jax.random.normal(ks[0], (H, H), jnp.float32) * std,
        "bq": jnp.zeros((1, H), jnp.float32),
        "wk": jax.random.normal(ks[1], (H, H), jnp.float32) * std,
        "bk": jnp.zeros((1, H), jnp.float32),
        "wv": jax.random.normal(ks[2], (H, H), jnp.float32) * std,
        "bv": jnp.zeros((1, H), jnp.float32),
        "wo": jax.random.normal(ks[3], (H, H), jnp.float32) * std,
        "bo": jnp.zeros((1, H), jnp.float32),
        "g1": jnp.ones((1, H), jnp.float32),
        "be1": jnp.zeros((1, H), jnp.float32),
        "wi": jax.random.normal(ks[4], (H, I), jnp.float32) * std,
        "bi": jnp.zeros((1, I), jnp.float32),
        "w2": jax.random.normal(ks[5], (I, H), jnp.float32) * std,
        "b2": jnp.zeros((1, H), jnp.float32),
        "g2": jnp.ones((1, H), jnp.float32),
        "be2": jnp.zeros((1, H), jnp.float32),
    }


if __name__ == "__main__":
    key = jax.random.PRNGKey(0)
    k_param, k_x = jax.random.split(key)

    params = init_params(k_param)
    packed = pack_params(params)          # one-time layout packing

    hidden_states = jax.random.normal(k_x, (B, S, H), jnp.float32)

    # Additive attention mask: batch 0 attends to all 8 tokens, batch 1 to 5.
    valid_lens = jnp.array([8, 5], dtype=jnp.int32)
    pos = jnp.arange(S)[None, :]                               # (1, S)
    keep = (pos < valid_lens[:, None]).astype(jnp.float32)     # (B, S)
    attention_mask = ((1.0 - keep) * -10000.0)[:, None, :]     # (B, 1, S)

    out = bert_layer(hidden_states, attention_mask, packed)
    jax.block_until_ready(out)
    assert out.shape == (B, S, H)

    ref = bert_layer_reference(hidden_states, attention_mask, params)
    max_err = float(jnp.max(jnp.abs(out - ref)))
    assert max_err < 1e-4, f"kernel/reference mismatch: max_err={max_err}"

    print("KERNEL_OK")
</pallas_src>

<mosaic_0001>
module attributes {stable_mosaic.version = 11 : i64} {
  func.func @bert_layer_kernel(%arg0: memref<16x32xf32, #tpu.memory_space<vmem>>, %arg1: memref<2x1x8xf32, #tpu.memory_space<vmem>>, %arg2: memref<32x128xf32, #tpu.memory_space<vmem>>, %arg3: memref<4x8x32xf32, #tpu.memory_space<vmem>>, %arg4: memref<32x128xf32, #tpu.memory_space<vmem>>, %arg5: memref<128x32xf32, #tpu.memory_space<vmem>>, %arg6: memref<8x128xf32, #tpu.memory_space<vmem>>, %arg7: memref<16x32xf32, #tpu.memory_space<vmem>>) attributes {dimension_semantics = [], scalar_prefetch = 0 : i64, scratch_operands = 0 : i64, tpu.core_type = #tpu.core_type<tc>} {
    %c0 = arith.constant 0 : index
    %c0_0 = arith.constant 0 : index
    %0 = vector.load %arg0[%c0, %c0_0] : memref<16x32xf32, #tpu.memory_space<vmem>>, vector<16x32xf32>
    %c0_1 = arith.constant 0 : index
    %c0_2 = arith.constant 0 : index
    %c0_3 = arith.constant 0 : index
    %1 = vector.load %arg1[%c0_1, %c0_2, %c0_3] : memref<2x1x8xf32, #tpu.memory_space<vmem>>, vector<2x1x8xf32>
    %c0_4 = arith.constant 0 : index
    %c0_5 = arith.constant 0 : index
    %2 = vector.load %arg6[%c0_4, %c0_5] : memref<8x128xf32, #tpu.memory_space<vmem>>, vector<8x128xf32>
    %3 = vector.extract_strided_slice %2 {offsets = [0, 0], sizes = [1, 128], strides = [1, 1]} : vector<8x128xf32> to vector<1x128xf32>
    %4 = vector.extract_strided_slice %2 {offsets = [1, 0], sizes = [1, 32], strides = [1, 1]} : vector<8x128xf32> to vector<1x32xf32>
    %5 = vector.extract_strided_slice %2 {offsets = [2, 0], sizes = [1, 32], strides = [1, 1]} : vector<8x128xf32> to vector<1x32xf32>
    %6 = vector.extract_strided_slice %2 {offsets = [3, 0], sizes = [1, 32], strides = [1, 1]} : vector<8x128xf32> to vector<1x32xf32>
    %7 = vector.extract_strided_slice %2 {offsets = [4, 0], sizes = [1, 128], strides = [1, 1]} : vector<8x128xf32> to vector<1x128xf32>
    %8 = vector.extract_strided_slice %2 {offsets = [5, 0], sizes = [1, 32], strides = [1, 1]} : vector<8x128xf32> to vector<1x32xf32>
    %9 = vector.extract_strided_slice %2 {offsets = [6, 0], sizes = [1, 32], strides = [1, 1]} : vector<8x128xf32> to vector<1x32xf32>
    %10 = vector.extract_strided_slice %2 {offsets = [7, 0], sizes = [1, 32], strides = [1, 1]} : vector<8x128xf32> to vector<1x32xf32>
    %c0_6 = arith.constant 0 : index
    %c0_7 = arith.constant 0 : index
    %11 = vector.load %arg2[%c0_6, %c0_7] : memref<32x128xf32, #tpu.memory_space<vmem>>, vector<32x128xf32>
    %cst = arith.constant dense<0.000000e+00> : vector<16x128xf32>
    %12 = tpu.matmul %0, %11, %cst {dimension_numbers = #tpu.dot_dimension_numbers<[1], [0], [0], [1], [0, 0, 1, 1], [], []>} : vector<16x32xf32>, vector<32x128xf32>, vector<16x128xf32> -> vector<16x128xf32>
    %13 = vector.broadcast %3 : vector<1x128xf32> to vector<16x128xf32>
    %14 = arith.addf %12, %13 : vector<16x128xf32>
    %15 = vector.extract_strided_slice %14 {offsets = [0, 0], sizes = [16, 8], strides = [1, 1]} : vector<16x128xf32> to vector<16x8xf32>
    %16 = vector.shape_cast %15 : vector<16x8xf32> to vector<2x8x8xf32>
    %17 = vector.extract_strided_slice %14 {offsets = [0, 8], sizes = [16, 8], strides = [1, 1]} : vector<16x128xf32> to vector<16x8xf32>
    %18 = vector.shape_cast %17 : vector<16x8xf32> to vector<2x8x8xf32>
    %19 = vector.extract_strided_slice %14 {offsets = [0, 16], sizes = [16, 8], strides = [1, 1]} : vector<16x128xf32> to vector<16x8xf32>
    %20 = vector.shape_cast %19 : vector<16x8xf32> to vector<2x8x8xf32>
    %21 = vector.extract_strided_slice %14 {offsets = [0, 24], sizes = [16, 8], strides = [1, 1]} : vector<16x128xf32> to vector<16x8xf32>
    %22 = vector.shape_cast %21 : vector<16x8xf32> to vector<2x8x8xf32>
    %23 = vector.shape_cast %16 : vector<2x8x8xf32> to vector<1x2x8x8xf32>
    %24 = vector.shape_cast %18 : vector<2x8x8xf32> to vector<1x2x8x8xf32>
    %25 = vector.shape_cast %20 : vector<2x8x8xf32> to vector<1x2x8x8xf32>
    %26 = vector.shape_cast %22 : vector<2x8x8xf32> to vector<1x2x8x8xf32>
    %27 = tpu.concatenate %23, %24, %25, %26 in 0 : vector<1x2x8x8xf32>, vector<1x2x8x8xf32>, vector<1x2x8x8xf32>, vector<1x2x8x8xf32> -> vector<4x2x8x8xf32>
    %28 = vector.shape_cast %27 : vector<4x2x8x8xf32> to vector<8x8x8xf32>
    %29 = vector.extract_strided_slice %14 {offsets = [0, 32], sizes = [16, 8], strides = [1, 1]} : vector<16x128xf32> to vector<16x8xf32>
    %30 = vector.shape_cast %29 : vector<16x8xf32> to vector<2x8x8xf32>
    %31 = vector.extract_strided_slice %14 {offsets = [0, 40], sizes = [16, 8], strides = [1, 1]} : vector<16x128xf32> to vector<16x8xf32>
    %32 = vector.shape_cast %31 : vector<16x8xf32> to vector<2x8x8xf32>
    %33 = vector.extract_strided_slice %14 {offsets = [0, 48], sizes = [16, 8], strides = [1, 1]} : vector<16x128xf32> to vector<16x8xf32>
    %34 = vector.shape_cast %33 : vector<16x8xf32> to vector<2x8x8xf32>
    %35 = vector.extract_strided_slice %14 {offsets = [0, 56], sizes = [16, 8], strides = [1, 1]} : vector<16x128xf32> to vector<16x8xf32>
    %36 = vector.shape_cast %35 : vector<16x8xf32> to vector<2x8x8xf32>
    %37 = vector.shape_cast %30 : vector<2x8x8xf32> to vector<1x2x8x8xf32>
    %38 = vector.shape_cast %32 : vector<2x8x8xf32> to vector<1x2x8x8xf32>
    %39 = vector.shape_cast %34 : vector<2x8x8xf32> to vector<1x2x8x8xf32>
    %40 = vector.shape_cast %36 : vector<2x8x8xf32> to vector<1x2x8x8xf32>
    %41 = tpu.concatenate %37, %38, %39, %40 in 0 : vector<1x2x8x8xf32>, vector<1x2x8x8xf32>, vector<1x2x8x8xf32>, vector<1x2x8x8xf32> -> vector<4x2x8x8xf32>
    %42 = vector.shape_cast %41 : vector<4x2x8x8xf32> to vector<8x8x8xf32>
    %43 = vector.extract_strided_slice %14 {offsets = [0, 64], sizes = [16, 8], strides = [1, 1]} : vector<16x128xf32> to vector<16x8xf32>
    %44 = vector.shape_cast %43 : vector<16x8xf32> to vector<2x8x8xf32>
    %45 = vector.extract_strided_slice %14 {offsets = [0, 72], sizes = [16, 8], strides = [1, 1]} : vector<16x128xf32> to vector<16x8xf32>
    %46 = vector.shape_cast %45 : vector<16x8xf32> to vector<2x8x8xf32>
    %47 = vector.extract_strided_slice %14 {offsets = [0, 80], sizes = [16, 8], strides = [1, 1]} : vector<16x128xf32> to vector<16x8xf32>
    %48 = vector.shape_cast %47 : vector<16x8xf32> to vector<2x8x8xf32>
    %49 = vector.extract_strided_slice %14 {offsets = [0, 88], sizes = [16, 8], strides = [1, 1]} : vector<16x128xf32> to vector<16x8xf32>
    %50 = vector.shape_cast %49 : vector<16x8xf32> to vector<2x8x8xf32>
    %51 = vector.shape_cast %44 : vector<2x8x8xf32> to vector<1x2x8x8xf32>
    %52 = vector.shape_cast %46 : vector<2x8x8xf32> to vector<1x2x8x8xf32>
    %53 = vector.shape_cast %48 : vector<2x8x8xf32> to vector<1x2x8x8xf32>
    %54 = vector.shape_cast %50 : vector<2x8x8xf32> to vector<1x2x8x8xf32>
    %55 = tpu.concatenate %51, %52, %53, %54 in 0 : vector<1x2x8x8xf32>, vector<1x2x8x8xf32>, vector<1x2x8x8xf32>, vector<1x2x8x8xf32> -> vector<4x2x8x8xf32>
    %56 = vector.shape_cast %55 : vector<4x2x8x8xf32> to vector<8x8x8xf32>
    "tpu.trace_start"() <{level = 10 : i32, message = "bqd,bkd->bqk"}> : () -> ()
    %cst_8 = arith.constant dense<0.000000e+00> : vector<8x8x8xf32>
    %57 = tpu.matmul %28, %42, %cst_8 {dimension_numbers = #tpu.dot_dimension_numbers<[2], [2], [1], [1], [0, 0, 0, 1, 1, 1], [0], [0]>} : vector<8x8x8xf32>, vector<8x8x8xf32>, vector<8x8x8xf32> -> vector<8x8x8xf32>
    "tpu.trace_stop"() : () -> ()
    %58 = vector.shape_cast %57 : vector<8x8x8xf32> to vector<4x2x8x8xf32>
    %59 = vector.shape_cast %1 : vector<2x1x8xf32> to vector<1x2x1x8xf32>
    %60 = vector.broadcast %59 : vector<1x2x1x8xf32> to vector<4x2x8x8xf32>
    %61 = arith.addf %58, %60 : vector<4x2x8x8xf32>
    %62 = vector.shape_cast %61 : vector<4x2x8x8xf32> to vector<8x8x8xf32>
    %cst_9 = arith.constant dense<0xFF800000> : vector<8x8xf32>
    %63 = vector.multi_reduction <maximumf>, %62, %cst_9 [2] : vector<8x8x8xf32> to vector<8x8xf32>
    %64 = vector.shape_cast %63 : vector<8x8xf32> to vector<8x8x1xf32>
    %65 = vector.broadcast %64 : vector<8x8x1xf32> to vector<8x8x8xf32>
    %66 = arith.subf %62, %65 : vector<8x8x8xf32>
    %67 = math.exp %66 : vector<8x8x8xf32>
    %cst_10 = arith.constant dense<0.000000e+00> : vector<8x8xf32>
    %68 = vector.multi_reduction <add>, %67, %cst_10 [2] : vector<8x8x8xf32> to vector<8x8xf32>
    %69 = vector.shape_cast %68 : vector<8x8xf32> to vector<8x8x1xf32>
    %70 = vector.broadcast %69 : vector<8x8x1xf32> to vector<8x8x8xf32>
    %71 = arith.divf %67, %70 : vector<8x8x8xf32>
    "tpu.trace_start"() <{level = 10 : i32, message = "bqk,bkd->bqd"}> : () -> ()
    %cst_11 = arith.constant dense<0.000000e+00> : vector<8x8x8xf32>
    %72 = tpu.matmul %71, %56, %cst_11 {dimension_numbers = #tpu.dot_dimension_numbers<[2], [1], [1], [2], [0, 0, 0, 1, 1, 2], [0], [0]>} : vector<8x8x8xf32>, vector<8x8x8xf32>, vector<8x8x8xf32> -> vector<8x8x8xf32>
    "tpu.trace_stop"() : () -> ()
    %73 = vector.shape_cast %72 : vector<8x8x8xf32> to vector<4x16x8xf32>
    %c0_12 = arith.constant 0 : index
    %c0_13 = arith.constant 0 : index
    %c0_14 = arith.constant 0 : index
    %74 = vector.load %arg3[%c0_12, %c0_13, %c0_14] : memref<4x8x32xf32, #tpu.memory_space<vmem>>, vector<4x8x32xf32>
    "tpu.trace_start"() <{level = 10 : i32, message = "hrd,hdo->hro"}> : () -> ()
    %cst_15 = arith.constant dense<0.000000e+00> : vector<4x16x32xf32>
    %75 = tpu.matmul %73, %74, %cst_15 {dimension_numbers = #tpu.dot_dimension_numbers<[2], [1], [1], [2], [0, 0, 0, 1, 1, 2], [0], [0]>} : vector<4x16x8xf32>, vector<4x8x32xf32>, vector<4x16x32xf32> -> vector<4x16x32xf32>
    "tpu.trace_stop"() : () -> ()
    %cst_16 = arith.constant dense<0.000000e+00> : vector<16x32xf32>
    %76 = vector.multi_reduction <add>, %75, %cst_16 [0] : vector<4x16x32xf32> to vector<16x32xf32>
    %77 = vector.broadcast %4 : vector<1x32xf32> to vector<16x32xf32>
    %78 = arith.addf %76, %77 : vector<16x32xf32>
    %79 = arith.addf %78, %0 : vector<16x32xf32>
    %cst_17 = arith.constant dense<0.000000e+00> : vector<16xf32>
    %80 = vector.multi_reduction <add>, %79, %cst_17 [1] : vector<16x32xf32> to vector<16xf32>
    %81 = vector.shape_cast %80 : vector<16xf32> to vector<16x1xf32>
    %cst_18 = arith.constant 3.200000e+01 : f32
    %82 = vector.broadcast %cst_18 : f32 to vector<16x1xf32>
    %83 = arith.divf %81, %82 : vector<16x1xf32>
    %84 = vector.broadcast %83 : vector<16x1xf32> to vector<16x32xf32>
    %85 = arith.subf %79, %84 : vector<16x32xf32>
    %86 = arith.mulf %85, %85 : vector<16x32xf32>
    %cst_19 = arith.constant dense<0.000000e+00> : vector<16xf32>
    %87 = vector.multi_reduction <add>, %86, %cst_19 [1] : vector<16x32xf32> to vector<16xf32>
    %88 = vector.shape_cast %87 : vector<16xf32> to vector<16x1xf32>
    %cst_20 = arith.constant 3.200000e+01 : f32
    %89 = vector.broadcast %cst_20 : f32 to vector<16x1xf32>
    %90 = arith.divf %88, %89 : vector<16x1xf32>
    %cst_21 = arith.constant 9.99999996E-13 : f32
    %91 = vector.broadcast %cst_21 : f32 to vector<16x1xf32>
    %92 = arith.addf %90, %91 : vector<16x1xf32>
    %93 = math.rsqrt %92 : vector<16x1xf32>
    %94 = vector.broadcast %93 : vector<16x1xf32> to vector<16x32xf32>
    %95 = arith.mulf %85, %94 : vector<16x32xf32>
    %96 = vector.broadcast %5 : vector<1x32xf32> to vector<16x32xf32>
    %97 = arith.mulf %95, %96 : vector<16x32xf32>
    %98 = vector.broadcast %6 : vector<1x32xf32> to vector<16x32xf32>
    %99 = arith.addf %97, %98 : vector<16x32xf32>
    %c0_22 = arith.constant 0 : index
    %c0_23 = arith.constant 0 : index
    %100 = vector.load %arg4[%c0_22, %c0_23] : memref<32x128xf32, #tpu.memory_space<vmem>>, vector<32x128xf32>
    %cst_24 = arith.constant dense<0.000000e+00> : vector<16x128xf32>
    %101 = tpu.matmul %99, %100, %cst_24 {dimension_numbers = #tpu.dot_dimension_numbers<[1], [0], [0], [1], [0, 0, 1, 1], [], []>} : vector<16x32xf32>, vector<32x128xf32>, vector<16x128xf32> -> vector<16x128xf32>
    %102 = vector.broadcast %7 : vector<1x128xf32> to vector<16x128xf32>
    %103 = arith.addf %101, %102 : vector<16x128xf32>
    %cst_25 = arith.constant 5.000000e-01 : f32
    %104 = vector.broadcast %cst_25 : f32 to vector<16x128xf32>
    %105 = arith.mulf %103, %104 : vector<16x128xf32>
    %cst_26 = arith.constant 0.707106769 : f32
    %106 = vector.broadcast %cst_26 : f32 to vector<16x128xf32>
    %107 = arith.mulf %103, %106 : vector<16x128xf32>
    %108 = math.erf %107 : vector<16x128xf32>
    %cst_27 = arith.constant 1.000000e+00 : f32
    %109 = vector.broadcast %cst_27 : f32 to vector<16x128xf32>
    %110 = arith.addf %109, %108 : vector<16x128xf32>
    %111 = arith.mulf %105, %110 : vector<16x128xf32>
    %c0_28 = arith.constant 0 : index
    %c0_29 = arith.constant 0 : index
    %112 = vector.load %arg5[%c0_28, %c0_29] : memref<128x32xf32, #tpu.memory_space<vmem>>, vector<128x32xf32>
    %cst_30 = arith.constant dense<0.000000e+00> : vector<16x32xf32>
    %113 = tpu.matmul %111, %112, %cst_30 {dimension_numbers = #tpu.dot_dimension_numbers<[1], [0], [0], [1], [0, 0, 1, 1], [], []>} : vector<16x128xf32>, vector<128x32xf32>, vector<16x32xf32> -> vector<16x32xf32>
    %114 = vector.broadcast %8 : vector<1x32xf32> to vector<16x32xf32>
    %115 = arith.addf %113, %114 : vector<16x32xf32>
    %116 = arith.addf %115, %99 : vector<16x32xf32>
    %cst_31 = arith.constant dense<0.000000e+00> : vector<16xf32>
    %117 = vector.multi_reduction <add>, %116, %cst_31 [1] : vector<16x32xf32> to vector<16xf32>
    %118 = vector.shape_cast %117 : vector<16xf32> to vector<16x1xf32>
    %cst_32 = arith.constant 3.200000e+01 : f32
    %119 = vector.broadcast %cst_32 : f32 to vector<16x1xf32>
    %120 = arith.divf %118, %119 : vector<16x1xf32>
    %121 = vector.broadcast %120 : vector<16x1xf32> to vector<16x32xf32>
    %122 = arith.subf %116, %121 : vector<16x32xf32>
    %123 = arith.mulf %122, %122 : vector<16x32xf32>
    %cst_33 = arith.constant dense<0.000000e+00> : vector<16xf32>
    %124 = vector.multi_reduction <add>, %123, %cst_33 [1] : vector<16x32xf32> to vector<16xf32>
    %125 = vector.shape_cast %124 : vector<16xf32> to vector<16x1xf32>
    %cst_34 = arith.constant 3.200000e+01 : f32
    %126 = vector.broadcast %cst_34 : f32 to vector<16x1xf32>
    %127 = arith.divf %125, %126 : vector<16x1xf32>
    %cst_35 = arith.constant 9.99999996E-13 : f32
    %128 = vector.broadcast %cst_35 : f32 to vector<16x1xf32>
    %129 = arith.addf %127, %128 : vector<16x1xf32>
    %130 = math.rsqrt %129 : vector<16x1xf32>
    %131 = vector.broadcast %130 : vector<16x1xf32> to vector<16x32xf32>
    %132 = arith.mulf %122, %131 : vector<16x32xf32>
    %133 = vector.broadcast %9 : vector<1x32xf32> to vector<16x32xf32>
    %134 = arith.mulf %132, %133 : vector<16x32xf32>
    %135 = vector.broadcast %10 : vector<1x32xf32> to vector<16x32xf32>
    %136 = arith.addf %134, %135 : vector<16x32xf32>
    %c0_36 = arith.constant 0 : index
    %c0_37 = arith.constant 0 : index
    %137 = vector.load %arg7[%c0_36, %c0_37] : memref<16x32xf32, #tpu.memory_space<vmem>>, vector<16x32xf32>
    tpu.vector_store %arg7[%c0_36, %c0_37], %136 {strides = array<i32>} : memref<16x32xf32, #tpu.memory_space<vmem>>, vector<16x32xf32>,
    return
  }
}

</mosaic_0001>

<llo_original>
// kernel: tpu_custom_call.1
$region0: #{tpu_custom_call.1}
  #allocation0 [shape = 'u32[]', space=smem, size = 0x4, offset = 0x4, fixed_abs, tag = 'smem constant byte address 0x4 - core index']
  #allocation1 [shape = 'u32[144,128]{1,0:T(1,128)}', space=vmem, size = 0x12000, scoped, tag = 'internal scratch']
  %s0 = inlined_call_operand.vmem [shape: f32[16,32], index: 0, kind: input, shape index: {}]
  %s1 = inlined_call_operand.vmem [shape: f32[2,1,8], index: 1, kind: input, shape index: {}]
  %s2 = inlined_call_operand.vmem [shape: f32[32,128], index: 2, kind: input, shape index: {}]
  %s3 = inlined_call_operand.vmem [shape: f32[4,8,32], index: 3, kind: input, shape index: {}]
  %s4 = inlined_call_operand.vmem [shape: f32[32,128], index: 4, kind: input, shape index: {}]
  %s5 = inlined_call_operand.vmem [shape: f32[128,32], index: 5, kind: input, shape index: {}]
  %s6 = inlined_call_operand.vmem [shape: f32[8,128], index: 6, kind: input, shape index: {}]
  %s7 = inlined_call_operand.hbm [shape: f32[16,32], index: 7, kind: output, shape index: {}]
  %s8 = sld [smem:[#allocation0]]
  $region38: #{tpu_custom_call.1} parent=0
    _
  %s10 = ssub.s32 1, %s8
  %s11 = scalar_select 0, %s10, %s8
  $region1: #{tpu_custom_call.1} parent=0
    #allocation2 [shape = 'u8[8192]{0}', space=vmem, size = 0x2000, scoped, tag = 'output window, operand 0, single buffered']
    #allocation3 [shape = 's32[1]{0}', space=sflag, size = 0x4, scoped, tag = 'scoped memory for tpu_custom_call.1']
    %12 = vsyncpa [#allocation3], 0
    // Predicated region
    $region2: #{tpu_custom_call.1} parent=1 // pred_check
      _
    $region3: #{tpu_custom_call.1} parent=1 // pred_check_branch
      %14 = sbr.rel (0) target = $region5
    $region4: #{tpu_custom_call.1} parent=1 // pred_region
      _
    $region5: #{tpu_custom_call.1} parent=1 // pred_fallthru
      _
    // Predicated region
    $region6: #{tpu_custom_call.1} parent=1 // pred_check
      _
    $region7: #{tpu_custom_call.1} parent=1 // pred_check_branch
      %16 = sbr.rel (0) target = $region9
    $region8: #{tpu_custom_call.1} parent=1 // pred_region
      _
    $region9: #{tpu_custom_call.1} parent=1 // pred_fallthru
      _
    // Predicated region
    $region10: #{tpu_custom_call.1} parent=1 // pred_check
      _
    $region11: #{tpu_custom_call.1} parent=1 // pred_check_branch
      %18 = sbr.rel (0) target = $region13
    $region12: #{tpu_custom_call.1} parent=1 // pred_region
      _
    $region13: #{tpu_custom_call.1} parent=1 // pred_fallthru
      _
    // Predicated region
    $region14: #{tpu_custom_call.1} parent=1 // pred_check
      _
    $region15: #{tpu_custom_call.1} parent=1 // pred_check_branch
      %20 = sbr.rel (0) target = $region17
    $region16: #{tpu_custom_call.1} parent=1 // pred_region
      _
    $region17: #{tpu_custom_call.1} parent=1 // pred_fallthru
      _
    // Predicated region
    $region18: #{tpu_custom_call.1} parent=1 // pred_check
      _
    $region19: #{tpu_custom_call.1} parent=1 // pred_check_branch
      %22 = sbr.rel (0) target = $region21
    $region20: #{tpu_custom_call.1} parent=1 // pred_region
      _
    $region21: #{tpu_custom_call.1} parent=1 // pred_fallthru
      _
    // Predicated region
    $region22: #{tpu_custom_call.1} parent=1 // pred_check
      _
    $region23: #{tpu_custom_call.1} parent=1 // pred_check_branch
      %24 = sbr.rel (0) target = $region25
    $region24: #{tpu_custom_call.1} parent=1 // pred_region
      _
    $region25: #{tpu_custom_call.1} parent=1 // pred_fallthru
      _
    // Predicated region
    $region26: #{tpu_custom_call.1} parent=1 // pred_check
      _
    $region27: #{tpu_custom_call.1} parent=1 // pred_check_branch
      %26 = sbr.rel (0) target = $region29
    $region28: #{tpu_custom_call.1} parent=1 // pred_region
      _
    $region29: #{tpu_custom_call.1} parent=1 // pred_fallthru
      _
    %v27 = vld [vmem:[%s0] sm:$0xff]
    %v28 = vld [vmem:[%s0 + $0x8] sm:$0xff]
    %v29 = vld [vmem:[%s1] sm:$0x1]
    %v30 = vld [vmem:[%s1 + $0x1] sm:$0x1]
    %v31 = vld [vmem:[%s6] sm:$0xff]
    %v32 = vld [vmem:[%s2] sm:$0xff]
    %v33 = vld [vmem:[%s2 + $0x8] sm:$0xff]
    %v34 = vld [vmem:[%s2 + $0x10] sm:$0xff]
    %v35 = vld [vmem:[%s2 + $0x18] sm:$0xff]
    %v36 = vlaneseq
    %v37 = vshrl.u32 %v36, 7
    %v38 = vsub.s32 0, %v37
    %v39 = vrot.slane %v31, %v38
    %vm40 = vcmask 261120
    %v42 = vsel %vm40, %v27, 0
    %v45 = vsel %vm40, %v28, 0
    %47 = vmatprep.subr.mxu0 0.0
    %48 = vmatpush1.msra.mxu0 %v32
    %49 = vmatprep.subr.mxu0 0.0
    %50 = vmatpush1.msra.mxu0 %v33
    %51 = vmatprep.subr.mxu0 0.0
    %52 = vmatpush1.msra.mxu0 %v34
    %53 = vmatprep.subr.mxu0 0.0
    %54 = vmatpush1.msra.mxu0 %v35
    %55 = vmatprep.subr.mxu0 0.0
    %56 = vmatpush1.msra.mxu0 0.0
    %57 = vmatprep.subr.mxu0 0.0
    %58 = vmatpush1.msra.mxu0 0.0
    %59 = vmatprep.subr.mxu0 0.0
    %60 = vmatpush1.msra.mxu0 0.0
    %61 = vmatprep.subr.mxu0 0.0
    %62 = vmatpush1.msra.mxu0 0.0
    %63 = vmatprep.subr.mxu0 0.0
    %64 = vmatpush1.msra.mxu0 0.0
    %65 = vmatprep.subr.mxu0 0.0
    %66 = vmatpush1.msra.mxu0 0.0
    %67 = vmatprep.subr.mxu0 0.0
    %68 = vmatpush1.msra.mxu0 0.0
    %69 = vmatprep.subr.mxu0 0.0
    %70 = vmatpush1.msra.mxu0 0.0
    %71 = vmatprep.subr.mxu0 0.0
    %72 = vmatpush1.msra.mxu0 0.0
    %73 = vmatprep.subr.mxu0 0.0
    %74 = vmatpush1.msra.mxu0 0.0
    %75 = vmatprep.subr.mxu0 0.0
    %76 = vmatpush1.msra.mxu0 0.0
    %77 = vmatprep.subr.mxu0 0.0
    %78 = vmatpush1.msra.mxu0 0.0
    %79 = vmatprep.subr.mxu0 0.0
    %80 = vmatpush1.msra.mxu0 0.0
    %81 = vmatprep.subr.mxu0 0.0
    %82 = vmatpush1.msra.mxu0 0.0
    %83 = vmatprep.subr.mxu0 0.0
    %84 = vmatpush1.msra.mxu0 0.0
    %85 = vmatprep.subr.mxu0 0.0
    %86 = vmatpush1.msra.mxu0 0.0
    %87 = vmatprep.subr.mxu0 0.0
    %88 = vmatpush1.msra.mxu0 0.0
    %89 = vmatprep.subr.mxu0 0.0
    %90 = vmatpush1.msra.mxu0 0.0
    %91 = vmatprep.subr.mxu0 0.0
    %92 = vmatpush1.msra.mxu0 0.0
    %93 = vmatprep.subr.mxu0 0.0
    %94 = vmatpush1.msra.mxu0 0.0
    %95 = vmatprep.subr.mxu0 0.0
    %96 = vmatpush1.msra.mxu0 0.0
    %97 = vmatprep.subr.mxu0 0.0
    %98 = vmatpush1.msra.mxu0 0.0
    %99 = vmatprep.subr.mxu0 0.0
    %100 = vmatpush1.msra.mxu0 0.0
    %101 = vmatprep.subr.mxu0 0.0
    %102 = vmatpush1.msra.mxu0 0.0
    %103 = vmatprep.subr.mxu0 0.0
    %104 = vmatpush1.msra.mxu0 0.0
    %105 = vmatprep.subr.mxu0 0.0
    %106 = vmatpush1.msra.mxu0 0.0
    %107 = vmatprep.subr.mxu0 0.0
    %108 = vmatpush1.msra.mxu0 0.0
    %109 = vmatprep.subr.mxu0 0.0
    %110 = vmatpush1.msra.mxu0 0.0
    %111 = vmatprep.mubr.f32.mxu0 0.0
    %112 = vmatmul.mubr.f32.gmra.mrb[0].mxu0 %v42
    %v113 = vpop.f32.mrb[0].mxu0
    %v114 = vadd.f32 %v39, %v113
    %v115 = vpop.f32.mrb[0].mxu0
    %116 = vmatprep.mubr.f32.mxu0 0.0
    %117 = vmatmul.mubr.f32.gmra.mrb[0].mxu0 %v45
    %v118 = vpop.f32.mrb[0].mxu0
    %v119 = vadd.f32 %v39, %v118
    %v120 = vpop.f32.mrb[0].mxu0
    %121 = vdwg.mxu0
    %124 = vrot.lane.b32.xlu0 %v114, 120
    %v125 = vpop.permute.xlu0 %124
    %126 = vrot.lane.b32.xlu0 %v119, 120
    %v127 = vpop.permute.xlu0 %126
    %128 = vrot.lane.b32.xlu0 %v114, 112
    %v129 = vpop.permute.xlu0 %128
    %130 = vrot.lane.b32.xlu0 %v119, 112
    %v131 = vpop.permute.xlu0 %130
    %132 = vrot.lane.b32.xlu0 %v114, 104
    %v133 = vpop.permute.xlu0 %132
    %134 = vrot.lane.b32.xlu0 %v119, 104
    %v135 = vpop.permute.xlu0 %134
    %136 = vrot.lane.b32.xlu0 %v114, 96
    %v137 = vpop.permute.xlu0 %136
    %vm138 = vcmask 64512
    %v139 = vsel %vm138, %v114, 0
    %v141 = vsel %vm138, %v137, 0
    %143 = vmatprep.subr.mxu0 0.0
    %144 = vmatpush1.xpose.msra.mxu0 %v141
    %145 = vmatprep.subr.mxu0 0.0
    %146 = vmatpush1.xpose.msra.mxu0 0.0
    %147 = vmatprep.subr.mxu0 0.0
    %148 = vmatpush1.xpose.msra.mxu0 0.0
    %149 = vmatprep.subr.mxu0 0.0
    %150 = vmatpush1.xpose.msra.mxu0 0.0
    %151 = vmatprep.subr.mxu0 0.0
    %152 = vmatpush1.xpose.msra.mxu0 0.0
    %153 = vmatprep.subr.mxu0 0.0
    %154 = vmatpush1.xpose.msra.mxu0 0.0
    %155 = vmatprep.subr.mxu0 0.0
    %156 = vmatpush1.xpose.msra.mxu0 0.0
    %157 = vmatprep.subr.mxu0 0.0
    %158 = vmatpush1.xpose.msra.mxu0 0.0
    %159 = vmatprep.subr.mxu0 0.0
    %160 = vmatpush1.xpose.msra.mxu0 0.0
    %161 = vmatprep.subr.mxu0 0.0
    %162 = vmatpush1.xpose.msra.mxu0 0.0
    %163 = vmatprep.subr.mxu0 0.0
    %164 = vmatpush1.xpose.msra.mxu0 0.0
    %165 = vmatprep.subr.mxu0 0.0
    %166 = vmatpush1.xpose.msra.mxu0 0.0
    %167 = vmatprep.subr.mxu0 0.0
    %168 = vmatpush1.xpose.msra.mxu0 0.0
    %169 = vmatprep.subr.mxu0 0.0
    %170 = vmatpush1.xpose.msra.mxu0 0.0
    %171 = vmatprep.subr.mxu0 0.0
    %172 = vmatpush1.xpose.msra.mxu0 0.0
    %173 = vmatprep.subr.mxu0 0.0
    %174 = vmatpush1.xpose.msra.mxu0 0.0
    %175 = vmatprep.subr.mxu0 0.0
    %176 = vmatpush1.xpose.msra.mxu0 0.0
    %177 = vmatprep.subr.mxu0 0.0
    %178 = vmatpush1.xpose.msra.mxu0 0.0
    %179 = vmatprep.subr.mxu0 0.0
    %180 = vmatpush1.xpose.msra.mxu0 0.0
    %181 = vmatprep.subr.mxu0 0.0
    %182 = vmatpush1.xpose.msra.mxu0 0.0
    %183 = vmatprep.subr.mxu0 0.0
    %184 = vmatpush1.xpose.msra.mxu0 0.0
    %185 = vmatprep.subr.mxu0 0.0
    %186 = vmatpush1.xpose.msra.mxu0 0.0
    %187 = vmatprep.subr.mxu0 0.0
    %188 = vmatpush1.xpose.msra.mxu0 0.0
    %189 = vmatprep.subr.mxu0 0.0
    %190 = vmatpush1.xpose.msra.mxu0 0.0
    %191 = vmatprep.subr.mxu0 0.0
    %192 = vmatpush1.xpose.msra.mxu0 0.0
    %193 = vmatprep.subr.mxu0 0.0
    %194 = vmatpush1.xpose.msra.mxu0 0.0
    %195 = vmatprep.subr.mxu0 0.0
    %196 = vmatpush1.xpose.msra.mxu0 0.0
    %197 = vmatprep.subr.mxu0 0.0
    %198 = vmatpush1.xpose.msra.mxu0 0.0
    %199 = vmatprep.subr.mxu0 0.0
    %200 = vmatpush1.xpose.msra.mxu0 0.0
    %201 = vmatprep.subr.mxu0 0.0
    %202 = vmatpush1.xpose.msra.mxu0 0.0
    %203 = vmatprep.subr.mxu0 0.0
    %204 = vmatpush1.xpose.msra.mxu0 0.0
    %205 = vmatprep.subr.mxu0 0.0
    %206 = vmatpush1.xpose.msra.mxu0 0.0
    %207 = vmatprep.mubr.f32.mxu0 0.0
    %208 = vmatmul.mubr.f32.gmra.mrb[0].mxu0 %v139
    %v209 = vpop.f32.mrb[0].mxu0
    %v210 = vadd.f32 0.0, %v209
    %v211 = vpop.f32.mrb[0].mxu0
    %212 = vdwg.mxu0
    %213 = vrot.lane.b32.xlu0 %v119, 96
    %v214 = vpop.permute.xlu0 %213
    %v215 = vsel %vm138, %v119, 0
    %v217 = vsel %vm138, %v214, 0
    %219 = vmatprep.subr.mxu0 0.0
    %220 = vmatpush1.xpose.msra.mxu0 %v217
    %221 = vmatprep.subr.mxu0 0.0
    %222 = vmatpush1.xpose.msra.mxu0 0.0
    %223 = vmatprep.subr.mxu0 0.0
    %224 = vmatpush1.xpose.msra.mxu0 0.0
    %225 = vmatprep.subr.mxu0 0.0
    %226 = vmatpush1.xpose.msra.mxu0 0.0
    %227 = vmatprep.subr.mxu0 0.0
    %228 = vmatpush1.xpose.msra.mxu0 0.0
    %229 = vmatprep.subr.mxu0 0.0
    %230 = vmatpush1.xpose.msra.mxu0 0.0
    %231 = vmatprep.subr.mxu0 0.0
    %232 = vmatpush1.xpose.msra.mxu0 0.0
    %233 = vmatprep.subr.mxu0 0.0
    %234 = vmatpush1.xpose.msra.mxu0 0.0
    %235 = vmatprep.subr.mxu0 0.0
    %236 = vmatpush1.xpose.msra.mxu0 0.0
    %237 = vmatprep.subr.mxu0 0.0
    %238 = vmatpush1.xpose.msra.mxu0 0.0
    %239 = vmatprep.subr.mxu0 0.0
    %240 = vmatpush1.xpose.msra.mxu0 0.0
    %241 = vmatprep.subr.mxu0 0.0
    %242 = vmatpush1.xpose.msra.mxu0 0.0
    %243 = vmatprep.subr.mxu0 0.0
    %244 = vmatpush1.xpose.msra.mxu0 0.0
    %245 = vmatprep.subr.mxu0 0.0
    %246 = vmatpush1.xpose.msra.mxu0 0.0
    %247 = vmatprep.subr.mxu0 0.0
    %248 = vmatpush1.xpose.msra.mxu0 0.0
    %249 = vmatprep.subr.mxu0 0.0
    %250 = vmatpush1.xpose.msra.mxu0 0.0
    %251 = vmatprep.subr.mxu0 0.0
    %252 = vmatpush1.xpose.msra.mxu0 0.0
    %253 = vmatprep.subr.mxu0 0.0
    %254 = vmatpush1.xpose.msra.mxu0 0.0
    %255 = vmatprep.subr.mxu0 0.0
    %256 = vmatpush1.xpose.msra.mxu0 0.0
    %257 = vmatprep.subr.mxu0 0.0
    %258 = vmatpush1.xpose.msra.mxu0 0.0
    %259 = vmatprep.subr.mxu0 0.0
    %260 = vmatpush1.xpose.msra.mxu0 0.0
    %261 = vmatprep.subr.mxu0 0.0
    %262 = vmatpush1.xpose.msra.mxu0 0.0
    %263 = vmatprep.subr.mxu0 0.0
    %264 = vmatpush1.xpose.msra.mxu0 0.0
    %265 = vmatprep.subr.mxu0 0.0
    %266 = vmatpush1.xpose.msra.mxu0 0.0
    %267 = vmatprep.subr.mxu0 0.0
    %268 = vmatpush1.xpose.msra.mxu0 0.0
    %269 = vmatprep.subr.mxu0 0.0
    %270 = vmatpush1.xpose.msra.mxu0 0.0
    %271 = vmatprep.subr.mxu0 0.0
    %272 = vmatpush1.xpose.msra.mxu0 0.0
    %273 = vmatprep.subr.mxu0 0.0
    %274 = vmatpush1.xpose.msra.mxu0 0.0
    %275 = vmatprep.subr.mxu0 0.0
    %276 = vmatpush1.xpose.msra.mxu0 0.0
    %277 = vmatprep.subr.mxu0 0.0
    %278 = vmatpush1.xpose.msra.mxu0 0.0
    %279 = vmatprep.subr.mxu0 0.0
    %280 = vmatpush1.xpose.msra.mxu0 0.0
    %281 = vmatprep.subr.mxu0 0.0
    %282 = vmatpush1.xpose.msra.mxu0 0.0
    %283 = vmatprep.mubr.f32.mxu0 0.0
    %284 = vmatmul.mubr.f32.gmra.mrb[0].mxu0 %v215
    %v285 = vpop.f32.mrb[0].mxu0
    %v286 = vadd.f32 0.0, %v285
    %v287 = vpop.f32.mrb[0].mxu0
    %288 = vdwg.mxu0
    %289 = vrot.lane.b32.xlu0 %v125, 96
    %v290 = vpop.permute.xlu0 %289
    %v291 = vsel %vm138, %v125, 0
    %v293 = vsel %vm138, %v290, 0
    %295 = vmatprep.subr.mxu0 0.0
    %296 = vmatpush1.xpose.msra.mxu0 %v293
    %297 = vmatprep.subr.mxu0 0.0
    %298 = vmatpush1.xpose.msra.mxu0 0.0
    %299 = vmatprep.subr.mxu0 0.0
    %300 = vmatpush1.xpose.msra.mxu0 0.0
    %301 = vmatprep.subr.mxu0 0.0
    %302 = vmatpush1.xpose.msra.mxu0 0.0
    %303 = vmatprep.subr.mxu0 0.0
    %304 = vmatpush1.xpose.msra.mxu0 0.0
    %305 = vmatprep.subr.mxu0 0.0
    %306 = vmatpush1.xpose.msra.mxu0 0.0
    %307 = vmatprep.subr.mxu0 0.0
    %308 = vmatpush1.xpose.msra.mxu0 0.0
    %309 = vmatprep.subr.mxu0 0.0
    %310 = vmatpush1.xpose.msra.mxu0 0.0
    %311 = vmatprep.subr.mxu0 0.0
    %312 = vmatpush1.xpose.msra.mxu0 0.0
    %313 = vmatprep.subr.mxu0 0.0
    %314 = vmatpush1.xpose.msra.mxu0 0.0
    %315 = vmatprep.subr.mxu0 0.0
    %316 = vmatpush1.xpose.msra.mxu0 0.0
    %317 = vmatprep.subr.mxu0 0.0
    %318 = vmatpush1.xpose.msra.mxu0 0.0
    %319 = vmatprep.subr.mxu0 0.0
    %320 = vmatpush1.xpose.msra.mxu0 0.0
    %321 = vmatprep.subr.mxu0 0.0
    %322 = vmatpush1.xpose.msra.mxu0 0.0
    %323 = vmatprep.subr.mxu0 0.0
    %324 = vmatpush1.xpose.msra.mxu0 0.0
    %325 = vmatprep.subr.mxu0 0.0
    %326 = vmatpush1.xpose.msra.mxu0 0.0
    %327 = vmatprep.subr.mxu0 0.0
    %328 = vmatpush1.xpose.msra.mxu0 0.0
    %329 = vmatprep.subr.mxu0 0.0
    %330 = vmatpush1.xpose.msra.mxu0 0.0
    %331 = vmatprep.subr.mxu0 0.0
    %332 = vmatpush1.xpose.msra.mxu0 0.0
    %333 = vmatprep.subr.mxu0 0.0
    %334 = vmatpush1.xpose.msra.mxu0 0.0
    %335 = vmatprep.subr.mxu0 0.0
    %336 = vmatpush1.xpose.msra.mxu0 0.0
    %337 = vmatprep.subr.mxu0 0.0
    %338 = vmatpush1.xpose.msra.mxu0 0.0
    %339 = vmatprep.subr.mxu0 0.0
    %340 = vmatpush1.xpose.msra.mxu0 0.0
    %341 = vmatprep.subr.mxu0 0.0
    %342 = vmatpush1.xpose.msra.mxu0 0.0
    %343 = vmatprep.subr.mxu0 0.0
    %344 = vmatpush1.xpose.msra.mxu0 0.0
    %345 = vmatprep.subr.mxu0 0.0
    %346 = vmatpush1.xpose.msra.mxu0 0.0
    %347 = vmatprep.subr.mxu0 0.0
    %348 = vmatpush1.xpose.msra.mxu0 0.0
    %349 = vmatprep.subr.mxu0 0.0
    %350 = vmatpush1.xpose.msra.mxu0 0.0
    %351 = vmatprep.subr.mxu0 0.0
    %352 = vmatpush1.xpose.msra.mxu0 0.0
    %353 = vmatprep.subr.mxu0 0.0
    %354 = vmatpush1.xpose.msra.mxu0 0.0
    %355 = vmatprep.subr.mxu0 0.0
    %356 = vmatpush1.xpose.msra.mxu0 0.0
    %357 = vmatprep.subr.mxu0 0.0
    %358 = vmatpush1.xpose.msra.mxu0 0.0
    %359 = vmatprep.mubr.f32.mxu0 0.0
    %360 = vmatmul.mubr.f32.gmra.mrb[0].mxu0 %v291
    %v361 = vpop.f32.mrb[0].mxu0
    %v362 = vadd.f32 0.0, %v361
    %v363 = vpop.f32.mrb[0].mxu0
    %364 = vdwg.mxu0
    %365 = vrot.lane.b32.xlu0 %v127, 96
    %v366 = vpop.permute.xlu0 %365
    %v367 = vsel %vm138, %v127, 0
    %v369 = vsel %vm138, %v366, 0
    %371 = vmatprep.subr.mxu0 0.0
    %372 = vmatpush1.xpose.msra.mxu0 %v369
    %373 = vmatprep.subr.mxu0 0.0
    %374 = vmatpush1.xpose.msra.mxu0 0.0
    %375 = vmatprep.subr.mxu0 0.0
    %376 = vmatpush1.xpose.msra.mxu0 0.0
    %377 = vmatprep.subr.mxu0 0.0
    %378 = vmatpush1.xpose.msra.mxu0 0.0
    %379 = vmatprep.subr.mxu0 0.0
    %380 = vmatpush1.xpose.msra.mxu0 0.0
    %381 = vmatprep.subr.mxu0 0.0
    %382 = vmatpush1.xpose.msra.mxu0 0.0
    %383 = vmatprep.subr.mxu0 0.0
    %384 = vmatpush1.xpose.msra.mxu0 0.0
    %385 = vmatprep.subr.mxu0 0.0
    %386 = vmatpush1.xpose.msra.mxu0 0.0
    %387 = vmatprep.subr.mxu0 0.0
    %388 = vmatpush1.xpose.msra.mxu0 0.0
    %389 = vmatprep.subr.mxu0 0.0
    %390 = vmatpush1.xpose.msra.mxu0 0.0
    %391 = vmatprep.subr.mxu0 0.0
    %392 = vmatpush1.xpose.msra.mxu0 0.0
    %393 = vmatprep.subr.mxu0 0.0
    %394 = vmatpush1.xpose.msra.mxu0 0.0
    %395 = vmatprep.subr.mxu0 0.0
    %396 = vmatpush1.xpose.msra.mxu0 0.0
    %397 = vmatprep.subr.mxu0 0.0
    %398 = vmatpush1.xpose.msra.mxu0 0.0
    %399 = vmatprep.subr.mxu0 0.0
    %400 = vmatpush1.xpose.msra.mxu0 0.0
    %401 = vmatprep.subr.mxu0 0.0
    %402 = vmatpush1.xpose.msra.mxu0 0.0
    %403 = vmatprep.subr.mxu0 0.0
    %404 = vmatpush1.xpose.msra.mxu0 0.0
    %405 = vmatprep.subr.mxu0 0.0
    %406 = vmatpush1.xpose.msra.mxu0 0.0
    %407 = vmatprep.subr.mxu0 0.0
    %408 = vmatpush1.xpose.msra.mxu0 0.0
    %409 = vmatprep.subr.mxu0 0.0
    %410 = vmatpush1.xpose.msra.mxu0 0.0
    %411 = vmatprep.subr.mxu0 0.0
    %412 = vmatpush1.xpose.msra.mxu0 0.0
    %413 = vmatprep.subr.mxu0 0.0
    %414 = vmatpush1.xpose.msra.mxu0 0.0
    %415 = vmatprep.subr.mxu0 0.0
    %416 = vmatpush1.xpose.msra.mxu0 0.0
    %417 = vmatprep.subr.mxu0 0.0
    %418 = vmatpush1.xpose.msra.mxu0 0.0
    %419 = vmatprep.subr.mxu0 0.0
    %420 = vmatpush1.xpose.msra.mxu0 0.0
    %421 = vmatprep.subr.mxu0 0.0
    %422 = vmatpush1.xpose.msra.mxu0 0.0
    %423 = vmatprep.subr.mxu0 0.0
    %424 = vmatpush1.xpose.msra.mxu0 0.0
    %425 = vmatprep.subr.mxu0 0.0
    %426 = vmatpush1.xpose.msra.mxu0 0.0
    %427 = vmatprep.subr.mxu0 0.0
    %428 = vmatpush1.xpose.msra.mxu0 0.0
    %429 = vmatprep.subr.mxu0 0.0
    %430 = vmatpush1.xpose.msra.mxu0 0.0
    %431 = vmatprep.subr.mxu0 0.0
    %432 = vmatpush1.xpose.msra.mxu0 0.0
    %433 = vmatprep.subr.mxu0 0.0
    %434 = vmatpush1.xpose.msra.mxu0 0.0
    %435 = vmatprep.mubr.f32.mxu0 0.0
    %436 = vmatmul.mubr.f32.gmra.mrb[0].mxu0 %v367
    %v437 = vpop.f32.mrb[0].mxu0
    %v438 = vadd.f32 0.0, %v437
    %v439 = vpop.f32.mrb[0].mxu0
    %440 = vdwg.mxu0
    %441 = vrot.lane.b32.xlu0 %v129, 96
    %v442 = vpop.permute.xlu0 %441
    %v443 = vsel %vm138, %v129, 0
    %v445 = vsel %vm138, %v442, 0
    %447 = vmatprep.subr.mxu0 0.0
    %448 = vmatpush1.xpose.msra.mxu0 %v445
    %449 = vmatprep.subr.mxu0 0.0
    %450 = vmatpush1.xpose.msra.mxu0 0.0
    %451 = vmatprep.subr.mxu0 0.0
    %452 = vmatpush1.xpose.msra.mxu0 0.0
    %453 = vmatprep.subr.mxu0 0.0
    %454 = vmatpush1.xpose.msra.mxu0 0.0
    %455 = vmatprep.subr.mxu0 0.0
    %456 = vmatpush1.xpose.msra.mxu0 0.0
    %457 = vmatprep.subr.mxu0 0.0
    %458 = vmatpush1.xpose.msra.mxu0 0.0
    %459 = vmatprep.subr.mxu0 0.0
    %460 = vmatpush1.xpose.msra.mxu0 0.0
    %461 = vmatprep.subr.mxu0 0.0
    %462 = vmatpush1.xpose.msra.mxu0 0.0
    %463 = vmatprep.subr.mxu0 0.0
    %464 = vmatpush1.xpose.msra.mxu0 0.0
    %465 = vmatprep.subr.mxu0 0.0
    %466 = vmatpush1.xpose.msra.mxu0 0.0
    %467 = vmatprep.subr.mxu0 0.0
    %468 = vmatpush1.xpose.msra.mxu0 0.0
    %469 = vmatprep.subr.mxu0 0.0
    %470 = vmatpush1.xpose.msra.mxu0 0.0
    %471 = vmatprep.subr.mxu0 0.0
    %472 = vmatpush1.xpose.msra.mxu0 0.0
    %473 = vmatprep.subr.mxu0 0.0
    %474 = vmatpush1.xpose.msra.mxu0 0.0
    %475 = vmatprep.subr.mxu0 0.0
    %476 = vmatpush1.xpose.msra.mxu0 0.0
    %477 = vmatprep.subr.mxu0 0.0
    %478 = vmatpush1.xpose.msra.mxu0 0.0
    %479 = vmatprep.subr.mxu0 0.0
    %480 = vmatpush1.xpose.msra.mxu0 0.0
    %481 = vmatprep.subr.mxu0 0.0
    %482 = vmatpush1.xpose.msra.mxu0 0.0
    %483 = vmatprep.subr.mxu0 0.0
    %484 = vmatpush1.xpose.msra.mxu0 0.0
    %485 = vmatprep.subr.mxu0 0.0
    %486 = vmatpush1.xpose.msra.mxu0 0.0
    %487 = vmatprep.subr.mxu0 0.0
    %488 = vmatpush1.xpose.msra.mxu0 0.0
    %489 = vmatprep.subr.mxu0 0.0
    %490 = vmatpush1.xpose.msra.mxu0 0.0
    %491 = vmatprep.subr.mxu0 0.0
    %492 = vmatpush1.xpose.msra.mxu0 0.0
    %493 = vmatprep.subr.mxu0 0.0
    %494 = vmatpush1.xpose.msra.mxu0 0.0
    %495 = vmatprep.subr.mxu0 0.0
    %496 = vmatpush1.xpose.msra.mxu0 0.0
    %497 = vmatprep.subr.mxu0 0.0
    %498 = vmatpush1.xpose.msra.mxu0 0.0
    %499 = vmatprep.subr.mxu0 0.0
    %500 = vmatpush1.xpose.msra.mxu0 0.0
    %501 = vmatprep.subr.mxu0 0.0
    %502 = vmatpush1.xpose.msra.mxu0 0.0
    %503 = vmatprep.subr.mxu0 0.0
    %504 = vmatpush1.xpose.msra.mxu0 0.0
    %505 = vmatprep.subr.mxu0 0.0
    %506 = vmatpush1.xpose.msra.mxu0 0.0
    %507 = vmatprep.subr.mxu0 0.0
    %508 = vmatpush1.xpose.msra.mxu0 0.0
    %509 = vmatprep.subr.mxu0 0.0
    %510 = vmatpush1.xpose.msra.mxu0 0.0
    %511 = vmatprep.mubr.f32.mxu0 0.0
    %512 = vmatmul.mubr.f32.gmra.mrb[0].mxu0 %v443
    %v513 = vpop.f32.mrb[0].mxu0
    %v514 = vadd.f32 0.0, %v513
    %v515 = vpop.f32.mrb[0].mxu0
    %516 = vdwg.mxu0
    %517 = vrot.lane.b32.xlu0 %v131, 96
    %v518 = vpop.permute.xlu0 %517
    %v519 = vsel %vm138, %v131, 0
    %v521 = vsel %vm138, %v518, 0
    %523 = vmatprep.subr.mxu0 0.0
    %524 = vmatpush1.xpose.msra.mxu0 %v521
    %525 = vmatprep.subr.mxu0 0.0
    %526 = vmatpush1.xpose.msra.mxu0 0.0
    %527 = vmatprep.subr.mxu0 0.0
    %528 = vmatpush1.xpose.msra.mxu0 0.0
    %529 = vmatprep.subr.mxu0 0.0
    %530 = vmatpush1.xpose.msra.mxu0 0.0
    %531 = vmatprep.subr.mxu0 0.0
    %532 = vmatpush1.xpose.msra.mxu0 0.0
    %533 = vmatprep.subr.mxu0 0.0
    %534 = vmatpush1.xpose.msra.mxu0 0.0
    %535 = vmatprep.subr.mxu0 0.0
    %536 = vmatpush1.xpose.msra.mxu0 0.0
    %537 = vmatprep.subr.mxu0 0.0
    %538 = vmatpush1.xpose.msra.mxu0 0.0
    %539 = vmatprep.subr.mxu0 0.0
    %540 = vmatpush1.xpose.msra.mxu0 0.0
    %541 = vmatprep.subr.mxu0 0.0
    %542 = vmatpush1.xpose.msra.mxu0 0.0
    %543 = vmatprep.subr.mxu0 0.0
    %544 = vmatpush1.xpose.msra.mxu0 0.0
    %545 = vmatprep.subr.mxu0 0.0
    %546 = vmatpush1.xpose.msra.mxu0 0.0
    %547 = vmatprep.subr.mxu0 0.0
    %548 = vmatpush1.xpose.msra.mxu0 0.0
    %549 = vmatprep.subr.mxu0 0.0
    %550 = vmatpush1.xpose.msra.mxu0 0.0
    %551 = vmatprep.subr.mxu0 0.0
    %552 = vmatpush1.xpose.msra.mxu0 0.0
    %553 = vmatprep.subr.mxu0 0.0
    %554 = vmatpush1.xpose.msra.mxu0 0.0
    %555 = vmatprep.subr.mxu0 0.0
    %556 = vmatpush1.xpose.msra.mxu0 0.0
    %557 = vmatprep.subr.mxu0 0.0
    %558 = vmatpush1.xpose.msra.mxu0 0.0
    %559 = vmatprep.subr.mxu0 0.0
    %560 = vmatpush1.xpose.msra.mxu0 0.0
    %561 = vmatprep.subr.mxu0 0.0
    %562 = vmatpush1.xpose.msra.mxu0 0.0
    %563 = vmatprep.subr.mxu0 0.0
    %564 = vmatpush1.xpose.msra.mxu0 0.0
    %565 = vmatprep.subr.mxu0 0.0
    %566 = vmatpush1.xpose.msra.mxu0 0.0
    %567 = vmatprep.subr.mxu0 0.0
    %568 = vmatpush1.xpose.msra.mxu0 0.0
    %569 = vmatprep.subr.mxu0 0.0
    %570 = vmatpush1.xpose.msra.mxu0 0.0
    %571 = vmatprep.subr.mxu0 0.0
    %572 = vmatpush1.xpose.msra.mxu0 0.0
    %573 = vmatprep.subr.mxu0 0.0
    %574 = vmatpush1.xpose.msra.mxu0 0.0
    %575 = vmatprep.subr.mxu0 0.0
    %576 = vmatpush1.xpose.msra.mxu0 0.0
    %577 = vmatprep.subr.mxu0 0.0
    %578 = vmatpush1.xpose.msra.mxu0 0.0
    %579 = vmatprep.subr.mxu0 0.0
    %580 = vmatpush1.xpose.msra.mxu0 0.0
    %581 = vmatprep.subr.mxu0 0.0
    %582 = vmatpush1.xpose.msra.mxu0 0.0
    %583 = vmatprep.subr.mxu0 0.0
    %584 = vmatpush1.xpose.msra.mxu0 0.0
    %585 = vmatprep.subr.mxu0 0.0
    %586 = vmatpush1.xpose.msra.mxu0 0.0
    %587 = vmatprep.mubr.f32.mxu0 0.0
    %588 = vmatmul.mubr.f32.gmra.mrb[0].mxu0 %v519
    %v589 = vpop.f32.mrb[0].mxu0
    %v590 = vadd.f32 0.0, %v589
    %v591 = vpop.f32.mrb[0].mxu0
    %592 = vdwg.mxu0
    %593 = vrot.lane.b32.xlu0 %v133, 96
    %v594 = vpop.permute.xlu0 %593
    %v595 = vsel %vm138, %v133, 0
    %v597 = vsel %vm138, %v594, 0
    %599 = vmatprep.subr.mxu0 0.0
    %600 = vmatpush1.xpose.msra.mxu0 %v597
    %601 = vmatprep.subr.mxu0 0.0
    %602 = vmatpush1.xpose.msra.mxu0 0.0
    %603 = vmatprep.subr.mxu0 0.0
    %604 = vmatpush1.xpose.msra.mxu0 0.0
    %605 = vmatprep.subr.mxu0 0.0
    %606 = vmatpush1.xpose.msra.mxu0 0.0
    %607 = vmatprep.subr.mxu0 0.0
    %608 = vmatpush1.xpose.msra.mxu0 0.0
    %609 = vmatprep.subr.mxu0 0.0
    %610 = vmatpush1.xpose.msra.mxu0 0.0
    %611 = vmatprep.subr.mxu0 0.0
    %612 = vmatpush1.xpose.msra.mxu0 0.0
    %613 = vmatprep.subr.mxu0 0.0
    %614 = vmatpush1.xpose.msra.mxu0 0.0
    %615 = vmatprep.subr.mxu0 0.0
    %616 = vmatpush1.xpose.msra.mxu0 0.0
    %617 = vmatprep.subr.mxu0 0.0
    %618 = vmatpush1.xpose.msra.mxu0 0.0
    %619 = vmatprep.subr.mxu0 0.0
    %620 = vmatpush1.xpose.msra.mxu0 0.0
    %621 = vmatprep.subr.mxu0 0.0
    %622 = vmatpush1.xpose.msra.mxu0 0.0
    %623 = vmatprep.subr.mxu0 0.0
    %624 = vmatpush1.xpose.msra.mxu0 0.0
    %625 = vmatprep.subr.mxu0 0.0
    %626 = vmatpush1.xpose.msra.mxu0 0.0
    %627 = vmatprep.subr.mxu0 0.0
    %628 = vmatpush1.xpose.msra.mxu0 0.0
    %629 = vmatprep.subr.mxu0 0.0
    %630 = vmatpush1.xpose.msra.mxu0 0.0
    %631 = vmatprep.subr.mxu0 0.0
    %632 = vmatpush1.xpose.msra.mxu0 0.0
    %633 = vmatprep.subr.mxu0 0.0
    %634 = vmatpush1.xpose.msra.mxu0 0.0
    %635 = vmatprep.subr.mxu0 0.0
    %636 = vmatpush1.xpose.msra.mxu0 0.0
    %637 = vmatprep.subr.mxu0 0.0
    %638 = vmatpush1.xpose.msra.mxu0 0.0
    %639 = vmatprep.subr.mxu0 0.0
    %640 = vmatpush1.xpose.msra.mxu0 0.0
    %641 = vmatprep.subr.mxu0 0.0
    %642 = vmatpush1.xpose.msra.mxu0 0.0
    %643 = vmatprep.subr.mxu0 0.0
    %644 = vmatpush1.xpose.msra.mxu0 0.0
    %645 = vmatprep.subr.mxu0 0.0
    %646 = vmatpush1.xpose.msra.mxu0 0.0
    %647 = vmatprep.subr.mxu0 0.0
    %648 = vmatpush1.xpose.msra.mxu0 0.0
    %649 = vmatprep.subr.mxu0 0.0
    %650 = vmatpush1.xpose.msra.mxu0 0.0
    %651 = vmatprep.subr.mxu0 0.0
    %652 = vmatpush1.xpose.msra.mxu0 0.0
    %653 = vmatprep.subr.mxu0 0.0
    %654 = vmatpush1.xpose.msra.mxu0 0.0
    %655 = vmatprep.subr.mxu0 0.0
    %656 = vmatpush1.xpose.msra.mxu0 0.0
    %657 = vmatprep.subr.mxu0 0.0
    %658 = vmatpush1.xpose.msra.mxu0 0.0
    %659 = vmatprep.subr.mxu0 0.0
    %660 = vmatpush1.xpose.msra.mxu0 0.0
    %661 = vmatprep.subr.mxu0 0.0
    %662 = vmatpush1.xpose.msra.mxu0 0.0
    %663 = vmatprep.mubr.f32.mxu0 0.0
    %664 = vmatmul.mubr.f32.gmra.mrb[0].mxu0 %v595
    %v665 = vpop.f32.mrb[0].mxu0
    %v666 = vadd.f32 0.0, %v665
    %v667 = vpop.f32.mrb[0].mxu0
    %668 = vdwg.mxu0
    %669 = vrot.lane.b32.xlu0 %v135, 96
    %v670 = vpop.permute.xlu0 %669
    %v671 = vsel %vm138, %v135, 0
    %v673 = vsel %vm138, %v670, 0
    %675 = vmatprep.subr.mxu0 0.0
    %676 = vmatpush1.xpose.msra.mxu0 %v673
    %677 = vmatprep.subr.mxu0 0.0
    %678 = vmatpush1.xpose.msra.mxu0 0.0
    %679 = vmatprep.subr.mxu0 0.0
    %680 = vmatpush1.xpose.msra.mxu0 0.0
    %681 = vmatprep.subr.mxu0 0.0
    %682 = vmatpush1.xpose.msra.mxu0 0.0
    %683 = vmatprep.subr.mxu0 0.0
    %684 = vmatpush1.xpose.msra.mxu0 0.0
    %685 = vmatprep.subr.mxu0 0.0
    %686 = vmatpush1.xpose.msra.mxu0 0.0
    %687 = vmatprep.subr.mxu0 0.0
    %688 = vmatpush1.xpose.msra.mxu0 0.0
    %689 = vmatprep.subr.mxu0 0.0
    %690 = vmatpush1.xpose.msra.mxu0 0.0
    %691 = vmatprep.subr.mxu0 0.0
    %692 = vmatpush1.xpose.msra.mxu0 0.0
    %693 = vmatprep.subr.mxu0 0.0
    %694 = vmatpush1.xpose.msra.mxu0 0.0
    %695 = vmatprep.subr.mxu0 0.0
    %696 = vmatpush1.xpose.msra.mxu0 0.0
    %697 = vmatprep.subr.mxu0 0.0
    %698 = vmatpush1.xpose.msra.mxu0 0.0
    %699 = vmatprep.subr.mxu0 0.0
    %700 = vmatpush1.xpose.msra.mxu0 0.0
    %701 = vmatprep.subr.mxu0 0.0
    %702 = vmatpush1.xpose.msra.mxu0 0.0
    %703 = vmatprep.subr.mxu0 0.0
    %704 = vmatpush1.xpose.msra.mxu0 0.0
    %705 = vmatprep.subr.mxu0 0.0
    %706 = vmatpush1.xpose.msra.mxu0 0.0
    %707 = vmatprep.subr.mxu0 0.0
    %708 = vmatpush1.xpose.msra.mxu0 0.0
    %709 = vmatprep.subr.mxu0 0.0
    %710 = vmatpush1.xpose.msra.mxu0 0.0
    %711 = vmatprep.subr.mxu0 0.0
    %712 = vmatpush1.xpose.msra.mxu0 0.0
    %713 = vmatprep.subr.mxu0 0.0
    %714 = vmatpush1.xpose.msra.mxu0 0.0
    %715 = vmatprep.subr.mxu0 0.0
    %716 = vmatpush1.xpose.msra.mxu0 0.0
    %717 = vmatprep.subr.mxu0 0.0
    %718 = vmatpush1.xpose.msra.mxu0 0.0
    %719 = vmatprep.subr.mxu0 0.0
    %720 = vmatpush1.xpose.msra.mxu0 0.0
    %721 = vmatprep.subr.mxu0 0.0
    %722 = vmatpush1.xpose.msra.mxu0 0.0
    %723 = vmatprep.subr.mxu0 0.0
    %724 = vmatpush1.xpose.msra.mxu0 0.0
    %725 = vmatprep.subr.mxu0 0.0
    %726 = vmatpush1.xpose.msra.mxu0 0.0
    %727 = vmatprep.subr.mxu0 0.0
    %728 = vmatpush1.xpose.msra.mxu0 0.0
    %729 = vmatprep.subr.mxu0 0.0
    %730 = vmatpush1.xpose.msra.mxu0 0.0
    %731 = vmatprep.subr.mxu0 0.0
    %732 = vmatpush1.xpose.msra.mxu0 0.0
    %733 = vmatprep.subr.mxu0 0.0
    %734 = vmatpush1.xpose.msra.mxu0 0.0
    %735 = vmatprep.subr.mxu0 0.0
    %736 = vmatpush1.xpose.msra.mxu0 0.0
    %737 = vmatprep.subr.mxu0 0.0
    %738 = vmatpush1.xpose.msra.mxu0 0.0
    %739 = vmatprep.mubr.f32.mxu0 0.0
    %740 = vmatmul.mubr.f32.gmra.mrb[0].mxu0 %v671
    %v741 = vpop.f32.mrb[0].mxu0
    %v742 = vadd.f32 0.0, %v741
    %v743 = vpop.f32.mrb[0].mxu0
    %744 = vdwg.mxu0
    %v747 = vlaneseq
    %v748 = vshrl.u32 %v747, 7
    %v749 = vsub.s32 0, %v748
    %v750 = vrot.slane %v29, %v749
    %v751 = vlaneseq
    %v752 = vshrl.u32 %v751, 7
    %v753 = vsub.s32 0, %v752
    %v754 = vrot.slane %v30, %v753
    %v757 = vadd.f32 %v210, %v750
    %v758 = vadd.f32 %v286, %v754
    %v759 = vadd.f32 %v362, %v750
    %v760 = vadd.f32 %v438, %v754
    %v761 = vadd.f32 %v514, %v750
    %v762 = vadd.f32 %v590, %v754
    %v763 = vadd.f32 %v666, %v750
    %v764 = vadd.f32 %v742, %v754
    %v765 = vsel %vm138, %v757, -inf
    %766 = vmax.xlane.f32.xlu0 %v765
    %v767 = vpop.xlane.xlu0 %766
    %v768 = vsel %vm138, %v758, -inf
    %769 = vmax.xlane.f32.xlu0 %v768
    %v770 = vpop.xlane.xlu0 %769
    %v771 = vsel %vm138, %v759, -inf
    %772 = vmax.xlane.f32.xlu0 %v771
    %v773 = vpop.xlane.xlu0 %772
    %v774 = vsel %vm138, %v760, -inf
    %775 = vmax.xlane.f32.xlu0 %v774
    %v776 = vpop.xlane.xlu0 %775
    %v777 = vsel %vm138, %v761, -inf
    %778 = vmax.xlane.f32.xlu0 %v777
    %v779 = vpop.xlane.xlu0 %778
    %v780 = vsel %vm138, %v762, -inf
    %781 = vmax.xlane.f32.xlu0 %v780
    %v782 = vpop.xlane.xlu0 %781
    %v783 = vsel %vm138, %v763, -inf
    %784 = vmax.xlane.f32.xlu0 %v783
    %v785 = vpop.xlane.xlu0 %784
    %v786 = vsel %vm138, %v764, -inf
    %787 = vmax.xlane.f32.xlu0 %v786
    %v788 = vpop.xlane.xlu0 %787
    %v789 = vsub.f32 %v757, %v767
    %v790 = vsub.f32 %v758, %v770
    %v791 = vsub.f32 %v759, %v773
    %v792 = vsub.f32 %v760, %v776
    %v793 = vsub.f32 %v761, %v779
    %v794 = vsub.f32 %v762, %v782
    %v795 = vsub.f32 %v763, %v785
    %v796 = vsub.f32 %v764, %v788
    %v797 = vmul.f32 %v789, 1.442695
    %v798 = vpow.pop %v797
    %v799 = vmul.f32 %v790, 1.442695
    %v800 = vpow.pop %v799
    %v801 = vmul.f32 %v791, 1.442695
    %v802 = vpow.pop %v801
    %v803 = vmul.f32 %v792, 1.442695
    %v804 = vpow.pop %v803
    %v805 = vmul.f32 %v793, 1.442695
    %v806 = vpow.pop %v805
    %v807 = vmul.f32 %v794, 1.442695
    %v808 = vpow.pop %v807
    %v809 = vmul.f32 %v795, 1.442695
    %v810 = vpow.pop %v809
    %v811 = vmul.f32 %v796, 1.442695
    %v812 = vpow.pop %v811
    %v813 = vsel %vm138, %v798, 0.0
    %814 = vadd.xlane.f32.xlu0 %v813
    %v815 = vpop.xlane.xlu0 %814
    %v816 = vsel %vm138, %v800, 0.0
    %817 = vadd.xlane.f32.xlu0 %v816
    %v818 = vpop.xlane.xlu0 %817
    %v819 = vsel %vm138, %v802, 0.0
    %820 = vadd.xlane.f32.xlu0 %v819
    %v821 = vpop.xlane.xlu0 %820
    %v822 = vsel %vm138, %v804, 0.0
    %823 = vadd.xlane.f32.xlu0 %v822
    %v824 = vpop.xlane.xlu0 %823
    %v825 = vsel %vm138, %v806, 0.0
    %826 = vadd.xlane.f32.xlu0 %v825
    %v827 = vpop.xlane.xlu0 %826
    %v828 = vsel %vm138, %v808, 0.0
    %829 = vadd.xlane.f32.xlu0 %v828
    %v830 = vpop.xlane.xlu0 %829
    %v831 = vsel %vm138, %v810, 0.0
    %832 = vadd.xlane.f32.xlu0 %v831
    %v833 = vpop.xlane.xlu0 %832
    %v834 = vsel %vm138, %v812, 0.0
    %835 = vadd.xlane.f32.xlu0 %v834
    %v836 = vpop.xlane.xlu0 %835
    %v837 = vrcp.pop %v815
    %v838 = vmul.f32 %v798, %v837
    %v839 = vrcp.pop %v818
    %v840 = vmul.f32 %v800, %v839
    %v841 = vrcp.pop %v821
    %v842 = vmul.f32 %v802, %v841
    %v843 = vrcp.pop %v824
    %v844 = vmul.f32 %v804, %v843
    %v845 = vrcp.pop %v827
    %v846 = vmul.f32 %v806, %v845
    %v847 = vrcp.pop %v830
    %v848 = vmul.f32 %v808, %v847
    %v849 = vrcp.pop %v833
    %v850 = vmul.f32 %v810, %v849
    %v851 = vrcp.pop %v836
    %v852 = vmul.f32 %v812, %v851
    %853 = vrot.lane.b32.xlu0 %v114, 64
    %v854 = vpop.permute.xlu0 %853
    %v857 = vsel %vm138, %v838, 0
    %859 = vmatprep.subr.mxu0 0.0
    %860 = vmatpush1.msra.mxu0 %v854
    %861 = vmatprep.subr.mxu0 0.0
    %862 = vmatpush1.msra.mxu0 0.0
    %863 = vmatprep.subr.mxu0 0.0
    %864 = vmatpush1.msra.mxu0 0.0
    %865 = vmatprep.subr.mxu0 0.0
    %866 = vmatpush1.msra.mxu0 0.0
    %867 = vmatprep.subr.mxu0 0.0
    %868 = vmatpush1.msra.mxu0 0.0
    %869 = vmatprep.subr.mxu0 0.0
    %870 = vmatpush1.msra.mxu0 0.0
    %871 = vmatprep.subr.mxu0 0.0
    %872 = vmatpush1.msra.mxu0 0.0
    %873 = vmatprep.subr.mxu0 0.0
    %874 = vmatpush1.msra.mxu0 0.0
    %875 = vmatprep.subr.mxu0 0.0
    %876 = vmatpush1.msra.mxu0 0.0
    %877 = vmatprep.subr.mxu0 0.0
    %878 = vmatpush1.msra.mxu0 0.0
    %879 = vmatprep.subr.mxu0 0.0
    %880 = vmatpush1.msra.mxu0 0.0
    %881 = vmatprep.subr.mxu0 0.0
    %882 = vmatpush1.msra.mxu0 0.0
    %883 = vmatprep.subr.mxu0 0.0
    %884 = vmatpush1.msra.mxu0 0.0
    %885 = vmatprep.subr.mxu0 0.0
    %886 = vmatpush1.msra.mxu0 0.0
    %887 = vmatprep.subr.mxu0 0.0
    %888 = vmatpush1.msra.mxu0 0.0
    %889 = vmatprep.subr.mxu0 0.0
    %890 = vmatpush1.msra.mxu0 0.0
    %891 = vmatprep.subr.mxu0 0.0
    %892 = vmatpush1.msra.mxu0 0.0
    %893 = vmatprep.subr.mxu0 0.0
    %894 = vmatpush1.msra.mxu0 0.0
    %895 = vmatprep.subr.mxu0 0.0
    %896 = vmatpush1.msra.mxu0 0.0
    %897 = vmatprep.subr.mxu0 0.0
    %898 = vmatpush1.msra.mxu0 0.0
    %899 = vmatprep.subr.mxu0 0.0
    %900 = vmatpush1.msra.mxu0 0.0
    %901 = vmatprep.subr.mxu0 0.0
    %902 = vmatpush1.msra.mxu0 0.0
    %903 = vmatprep.subr.mxu0 0.0
    %904 = vmatpush1.msra.mxu0 0.0
    %905 = vmatprep.subr.mxu0 0.0
    %906 = vmatpush1.msra.mxu0 0.0
    %907 = vmatprep.subr.mxu0 0.0
    %908 = vmatpush1.msra.mxu0 0.0
    %909 = vmatprep.subr.mxu0 0.0
    %910 = vmatpush1.msra.mxu0 0.0
    %911 = vmatprep.subr.mxu0 0.0
    %912 = vmatpush1.msra.mxu0 0.0
    %913 = vmatprep.subr.mxu0 0.0
    %914 = vmatpush1.msra.mxu0 0.0
    %915 = vmatprep.subr.mxu0 0.0
    %916 = vmatpush1.msra.mxu0 0.0
    %917 = vmatprep.subr.mxu0 0.0
    %918 = vmatpush1.msra.mxu0 0.0
    %919 = vmatprep.subr.mxu0 0.0
    %920 = vmatpush1.msra.mxu0 0.0
    %921 = vmatprep.subr.mxu0 0.0
    %922 = vmatpush1.msra.mxu0 0.0
    %923 = vmatprep.mubr.f32.mxu0 0.0
    %924 = vmatmul.mubr.f32.gmra.mrb[0].mxu0 %v857
    %v925 = vpop.f32.mrb[0].mxu0
    %v926 = vadd.f32 0.0, %v925
    %v927 = vpop.f32.mrb[0].mxu0
    %928 = vdwg.mxu0
    %929 = vrot.lane.b32.xlu0 %v119, 64
    %v930 = vpop.permute.xlu0 %929
    %v933 = vsel %vm138, %v840, 0
    %935 = vmatprep.subr.mxu0 0.0
    %936 = vmatpush1.msra.mxu0 %v930
    %937 = vmatprep.subr.mxu0 0.0
    %938 = vmatpush1.msra.mxu0 0.0
    %939 = vmatprep.subr.mxu0 0.0
    %940 = vmatpush1.msra.mxu0 0.0
    %941 = vmatprep.subr.mxu0 0.0
    %942 = vmatpush1.msra.mxu0 0.0
    %943 = vmatprep.subr.mxu0 0.0
    %944 = vmatpush1.msra.mxu0 0.0
    %945 = vmatprep.subr.mxu0 0.0
    %946 = vmatpush1.msra.mxu0 0.0
    %947 = vmatprep.subr.mxu0 0.0
    %948 = vmatpush1.msra.mxu0 0.0
    %949 = vmatprep.subr.mxu0 0.0
    %950 = vmatpush1.msra.mxu0 0.0
    %951 = vmatprep.subr.mxu0 0.0
    %952 = vmatpush1.msra.mxu0 0.0
    %953 = vmatprep.subr.mxu0 0.0
    %954 = vmatpush1.msra.mxu0 0.0
    %955 = vmatprep.subr.mxu0 0.0
    %956 = vmatpush1.msra.mxu0 0.0
    %957 = vmatprep.subr.mxu0 0.0
    %958 = vmatpush1.msra.mxu0 0.0
    %959 = vmatprep.subr.mxu0 0.0
    %960 = vmatpush1.msra.mxu0 0.0
    %961 = vmatprep.subr.mxu0 0.0
    %962 = vmatpush1.msra.mxu0 0.0
    %963 = vmatprep.subr.mxu0 0.0
    %964 = vmatpush1.msra.mxu0 0.0
    %965 = vmatprep.subr.mxu0 0.0
    %966 = vmatpush1.msra.mxu0 0.0
    %967 = vmatprep.subr.mxu0 0.0
    %968 = vmatpush1.msra.mxu0 0.0
    %969 = vmatprep.subr.mxu0 0.0
    %970 = vmatpush1.msra.mxu0 0.0
    %971 = vmatprep.subr.mxu0 0.0
    %972 = vmatpush1.msra.mxu0 0.0
    %973 = vmatprep.subr.mxu0 0.0
    %974 = vmatpush1.msra.mxu0 0.0
    %975 = vmatprep.subr.mxu0 0.0
    %976 = vmatpush1.msra.mxu0 0.0
    %977 = vmatprep.subr.mxu0 0.0
    %978 = vmatpush1.msra.mxu0 0.0
    %979 = vmatprep.subr.mxu0 0.0
    %980 = vmatpush1.msra.mxu0 0.0
    %981 = vmatprep.subr.mxu0 0.0
    %982 = vmatpush1.msra.mxu0 0.0
    %983 = vmatprep.subr.mxu0 0.0
    %984 = vmatpush1.msra.mxu0 0.0
    %985 = vmatprep.subr.mxu0 0.0
    %986 = vmatpush1.msra.mxu0 0.0
    %987 = vmatprep.subr.mxu0 0.0
    %988 = vmatpush1.msra.mxu0 0.0
    %989 = vmatprep.subr.mxu0 0.0
    %990 = vmatpush1.msra.mxu0 0.0
    %991 = vmatprep.subr.mxu0 0.0
    %992 = vmatpush1.msra.mxu0 0.0
    %993 = vmatprep.subr.mxu0 0.0
    %994 = vmatpush1.msra.mxu0 0.0
    %995 = vmatprep.subr.mxu0 0.0
    %996 = vmatpush1.msra.mxu0 0.0
    %997 = vmatprep.subr.mxu0 0.0
    %998 = vmatpush1.msra.mxu0 0.0
    %999 = vmatprep.mubr.f32.mxu0 0.0
    %1000 = vmatmul.mubr.f32.gmra.mrb[0].mxu0 %v933
    %v1001 = vpop.f32.mrb[0].mxu0
    %v1002 = vadd.f32 0.0, %v1001
    %v1003 = vpop.f32.mrb[0].mxu0
    %1004 = vdwg.mxu0
    %1005 = vrot.lane.b32.xlu0 %v125, 64
    %v1006 = vpop.permute.xlu0 %1005
    %v1009 = vsel %vm138, %v842, 0
    %1011 = vmatprep.subr.mxu0 0.0
    %1012 = vmatpush1.msra.mxu0 %v1006
    %1013 = vmatprep.subr.mxu0 0.0
    %1014 = vmatpush1.msra.mxu0 0.0
    %1015 = vmatprep.subr.mxu0 0.0
    %1016 = vmatpush1.msra.mxu0 0.0
    %1017 = vmatprep.subr.mxu0 0.0
    %1018 = vmatpush1.msra.mxu0 0.0
    %1019 = vmatprep.subr.mxu0 0.0
    %1020 = vmatpush1.msra.mxu0 0.0
    %1021 = vmatprep.subr.mxu0 0.0
    %1022 = vmatpush1.msra.mxu0 0.0
    %1023 = vmatprep.subr.mxu0 0.0
    %1024 = vmatpush1.msra.mxu0 0.0
    %1025 = vmatprep.subr.mxu0 0.0
    %1026 = vmatpush1.msra.mxu0 0.0
    %1027 = vmatprep.subr.mxu0 0.0
    %1028 = vmatpush1.msra.mxu0 0.0
    %1029 = vmatprep.subr.mxu0 0.0
    %1030 = vmatpush1.msra.mxu0 0.0
    %1031 = vmatprep.subr.mxu0 0.0
    %1032 = vmatpush1.msra.mxu0 0.0
    %1033 = vmatprep.subr.mxu0 0.0
    %1034 = vmatpush1.msra.mxu0 0.0
    %1035 = vmatprep.subr.mxu0 0.0
    %1036 = vmatpush1.msra.mxu0 0.0
    %1037 = vmatprep.subr.mxu0 0.0
    %1038 = vmatpush1.msra.mxu0 0.0
    %1039 = vmatprep.subr.mxu0 0.0
    %1040 = vmatpush1.msra.mxu0 0.0
    %1041 = vmatprep.subr.mxu0 0.0
    %1042 = vmatpush1.msra.mxu0 0.0
    %1043 = vmatprep.subr.mxu0 0.0
    %1044 = vmatpush1.msra.mxu0 0.0
    %1045 = vmatprep.subr.mxu0 0.0
    %1046 = vmatpush1.msra.mxu0 0.0
    %1047 = vmatprep.subr.mxu0 0.0
    %1048 = vmatpush1.msra.mxu0 0.0
    %1049 = vmatprep.subr.mxu0 0.0
    %1050 = vmatpush1.msra.mxu0 0.0
    %1051 = vmatprep.subr.mxu0 0.0
    %1052 = vmatpush1.msra.mxu0 0.0
    %1053 = vmatprep.subr.mxu0 0.0
    %1054 = vmatpush1.msra.mxu0 0.0
    %1055 = vmatprep.subr.mxu0 0.0
    %1056 = vmatpush1.msra.mxu0 0.0
    %1057 = vmatprep.subr.mxu0 0.0
    %1058 = vmatpush1.msra.mxu0 0.0
    %1059 = vmatprep.subr.mxu0 0.0
    %1060 = vmatpush1.msra.mxu0 0.0
    %1061 = vmatprep.subr.mxu0 0.0
    %1062 = vmatpush1.msra.mxu0 0.0
    %1063 = vmatprep.subr.mxu0 0.0
    %1064 = vmatpush1.msra.mxu0 0.0
    %1065 = vmatprep.subr.mxu0 0.0
    %1066 = vmatpush1.msra.mxu0 0.0
    %1067 = vmatprep.subr.mxu0 0.0
    %1068 = vmatpush1.msra.mxu0 0.0
    %1069 = vmatprep.subr.mxu0 0.0
    %1070 = vmatpush1.msra.mxu0 0.0
    %1071 = vmatprep.subr.mxu0 0.0
    %1072 = vmatpush1.msra.mxu0 0.0
    %1073 = vmatprep.subr.mxu0 0.0
    %1074 = vmatpush1.msra.mxu0 0.0
    %1075 = vmatprep.mubr.f32.mxu0 0.0
    %1076 = vmatmul.mubr.f32.gmra.mrb[0].mxu0 %v1009
    %v1077 = vpop.f32.mrb[0].mxu0
    %v1078 = vadd.f32 0.0, %v1077
    %v1079 = vpop.f32.mrb[0].mxu0
    %1080 = vdwg.mxu0
    %1081 = vrot.lane.b32.xlu0 %v127, 64
    %v1082 = vpop.permute.xlu0 %1081
    %v1085 = vsel %vm138, %v844, 0
    %1087 = vmatprep.subr.mxu0 0.0
    %1088 = vmatpush1.msra.mxu0 %v1082
    %1089 = vmatprep.subr.mxu0 0.0
    %1090 = vmatpush1.msra.mxu0 0.0
    %1091 = vmatprep.subr.mxu0 0.0
    %1092 = vmatpush1.msra.mxu0 0.0
    %1093 = vmatprep.subr.mxu0 0.0
    %1094 = vmatpush1.msra.mxu0 0.0
    %1095 = vmatprep.subr.mxu0 0.0
    %1096 = vmatpush1.msra.mxu0 0.0
    %1097 = vmatprep.subr.mxu0 0.0
    %1098 = vmatpush1.msra.mxu0 0.0
    %1099 = vmatprep.subr.mxu0 0.0
    %1100 = vmatpush1.msra.mxu0 0.0
    %1101 = vmatprep.subr.mxu0 0.0
    %1102 = vmatpush1.msra.mxu0 0.0
    %1103 = vmatprep.subr.mxu0 0.0
    %1104 = vmatpush1.msra.mxu0 0.0
    %1105 = vmatprep.subr.mxu0 0.0
    %1106 = vmatpush1.msra.mxu0 0.0
    %1107 = vmatprep.subr.mxu0 0.0
    %1108 = vmatpush1.msra.mxu0 0.0
    %1109 = vmatprep.subr.mxu0 0.0
    %1110 = vmatpush1.msra.mxu0 0.0
    %1111 = vmatprep.subr.mxu0 0.0
    %1112 = vmatpush1.msra.mxu0 0.0
    %1113 = vmatprep.subr.mxu0 0.0
    %1114 = vmatpush1.msra.mxu0 0.0
    %1115 = vmatprep.subr.mxu0 0.0
    %1116 = vmatpush1.msra.mxu0 0.0
    %1117 = vmatprep.subr.mxu0 0.0
    %1118 = vmatpush1.msra.mxu0 0.0
    %1119 = vmatprep.subr.mxu0 0.0
    %1120 = vmatpush1.msra.mxu0 0.0
    %1121 = vmatprep.subr.mxu0 0.0
    %1122 = vmatpush1.msra.mxu0 0.0
    %1123 = vmatprep.subr.mxu0 0.0
    %1124 = vmatpush1.msra.mxu0 0.0
    %1125 = vmatprep.subr.mxu0 0.0
    %1126 = vmatpush1.msra.mxu0 0.0
    %1127 = vmatprep.subr.mxu0 0.0
    %1128 = vmatpush1.msra.mxu0 0.0
    %1129 = vmatprep.subr.mxu0 0.0
    %1130 = vmatpush1.msra.mxu0 0.0
    %1131 = vmatprep.subr.mxu0 0.0
    %1132 = vmatpush1.msra.mxu0 0.0
    %1133 = vmatprep.subr.mxu0 0.0
    %1134 = vmatpush1.msra.mxu0 0.0
    %1135 = vmatprep.subr.mxu0 0.0
    %1136 = vmatpush1.msra.mxu0 0.0
    %1137 = vmatprep.subr.mxu0 0.0
    %1138 = vmatpush1.msra.mxu0 0.0
    %1139 = vmatprep.subr.mxu0 0.0
    %1140 = vmatpush1.msra.mxu0 0.0
    %1141 = vmatprep.subr.mxu0 0.0
    %1142 = vmatpush1.msra.mxu0 0.0
    %1143 = vmatprep.subr.mxu0 0.0
    %1144 = vmatpush1.msra.mxu0 0.0
    %1145 = vmatprep.subr.mxu0 0.0
    %1146 = vmatpush1.msra.mxu0 0.0
    %1147 = vmatprep.subr.mxu0 0.0
    %1148 = vmatpush1.msra.mxu0 0.0
    %1149 = vmatprep.subr.mxu0 0.0
    %1150 = vmatpush1.msra.mxu0 0.0
    %1151 = vmatprep.mubr.f32.mxu0 0.0
    %1152 = vmatmul.mubr.f32.gmra.mrb[0].mxu0 %v1085
    %v1153 = vpop.f32.mrb[0].mxu0
    %v1154 = vadd.f32 0.0, %v1153
    %v1155 = vpop.f32.mrb[0].mxu0
    %1156 = vdwg.mxu0
    %1157 = vrot.lane.b32.xlu0 %v129, 64
    %v1158 = vpop.permute.xlu0 %1157
    %v1161 = vsel %vm138, %v846, 0
    %1163 = vmatprep.subr.mxu0 0.0
    %1164 = vmatpush1.msra.mxu0 %v1158
    %1165 = vmatprep.subr.mxu0 0.0
    %1166 = vmatpush1.msra.mxu0 0.0
    %1167 = vmatprep.subr.mxu0 0.0
    %1168 = vmatpush1.msra.mxu0 0.0
    %1169 = vmatprep.subr.mxu0 0.0
    %1170 = vmatpush1.msra.mxu0 0.0
    %1171 = vmatprep.subr.mxu0 0.0
    %1172 = vmatpush1.msra.mxu0 0.0
    %1173 = vmatprep.subr.mxu0 0.0
    %1174 = vmatpush1.msra.mxu0 0.0
    %1175 = vmatprep.subr.mxu0 0.0
    %1176 = vmatpush1.msra.mxu0 0.0
    %1177 = vmatprep.subr.mxu0 0.0
    %1178 = vmatpush1.msra.mxu0 0.0
    %1179 = vmatprep.subr.mxu0 0.0
    %1180 = vmatpush1.msra.mxu0 0.0
    %1181 = vmatprep.subr.mxu0 0.0
    %1182 = vmatpush1.msra.mxu0 0.0
    %1183 = vmatprep.subr.mxu0 0.0
    %1184 = vmatpush1.msra.mxu0 0.0
    %1185 = vmatprep.subr.mxu0 0.0
    %1186 = vmatpush1.msra.mxu0 0.0
    %1187 = vmatprep.subr.mxu0 0.0
    %1188 = vmatpush1.msra.mxu0 0.0
    %1189 = vmatprep.subr.mxu0 0.0
    %1190 = vmatpush1.msra.mxu0 0.0
    %1191 = vmatprep.subr.mxu0 0.0
    %1192 = vmatpush1.msra.mxu0 0.0
    %1193 = vmatprep.subr.mxu0 0.0
    %1194 = vmatpush1.msra.mxu0 0.0
    %1195 = vmatprep.subr.mxu0 0.0
    %1196 = vmatpush1.msra.mxu0 0.0
    %1197 = vmatprep.subr.mxu0 0.0
    %1198 = vmatpush1.msra.mxu0 0.0
    %1199 = vmatprep.subr.mxu0 0.0
    %1200 = vmatpush1.msra.mxu0 0.0
    %1201 = vmatprep.subr.mxu0 0.0
    %1202 = vmatpush1.msra.mxu0 0.0
    %1203 = vmatprep.subr.mxu0 0.0
    %1204 = vmatpush1.msra.mxu0 0.0
    %1205 = vmatprep.subr.mxu0 0.0
    %1206 = vmatpush1.msra.mxu0 0.0
    %1207 = vmatprep.subr.mxu0 0.0
    %1208 = vmatpush1.msra.mxu0 0.0
    %1209 = vmatprep.subr.mxu0 0.0
    %1210 = vmatpush1.msra.mxu0 0.0
    %1211 = vmatprep.subr.mxu0 0.0
    %1212 = vmatpush1.msra.mxu0 0.0
    %1213 = vmatprep.subr.mxu0 0.0
    %1214 = vmatpush1.msra.mxu0 0.0
    %1215 = vmatprep.subr.mxu0 0.0
    %1216 = vmatpush1.msra.mxu0 0.0
    %1217 = vmatprep.subr.mxu0 0.0
    %1218 = vmatpush1.msra.mxu0 0.0
    %1219 = vmatprep.subr.mxu0 0.0
    %1220 = vmatpush1.msra.mxu0 0.0
    %1221 = vmatprep.subr.mxu0 0.0
    %1222 = vmatpush1.msra.mxu0 0.0
    %1223 = vmatprep.subr.mxu0 0.0
    %1224 = vmatpush1.msra.mxu0 0.0
    %1225 = vmatprep.subr.mxu0 0.0
    %1226 = vmatpush1.msra.mxu0 0.0
    %1227 = vmatprep.mubr.f32.mxu0 0.0
    %1228 = vmatmul.mubr.f32.gmra.mrb[0].mxu0 %v1161
    %v1229 = vpop.f32.mrb[0].mxu0
    %v1230 = vadd.f32 0.0, %v1229
    %v1231 = vpop.f32.mrb[0].mxu0
    %1232 = vdwg.mxu0
    %1233 = vrot.lane.b32.xlu0 %v131, 64
    %v1234 = vpop.permute.xlu0 %1233
    %v1237 = vsel %vm138, %v848, 0
    %1239 = vmatprep.subr.mxu0 0.0
    %1240 = vmatpush1.msra.mxu0 %v1234
    %1241 = vmatprep.subr.mxu0 0.0
    %1242 = vmatpush1.msra.mxu0 0.0
    %1243 = vmatprep.subr.mxu0 0.0
    %1244 = vmatpush1.msra.mxu0 0.0
    %1245 = vmatprep.subr.mxu0 0.0
    %1246 = vmatpush1.msra.mxu0 0.0
    %1247 = vmatprep.subr.mxu0 0.0
    %1248 = vmatpush1.msra.mxu0 0.0
    %1249 = vmatprep.subr.mxu0 0.0
    %1250 = vmatpush1.msra.mxu0 0.0
    %1251 = vmatprep.subr.mxu0 0.0
    %1252 = vmatpush1.msra.mxu0 0.0
    %1253 = vmatprep.subr.mxu0 0.0
    %1254 = vmatpush1.msra.mxu0 0.0
    %1255 = vmatprep.subr.mxu0 0.0
    %1256 = vmatpush1.msra.mxu0 0.0
    %1257 = vmatprep.subr.mxu0 0.0
    %1258 = vmatpush1.msra.mxu0 0.0
    %1259 = vmatprep.subr.mxu0 0.0
    %1260 = vmatpush1.msra.mxu0 0.0
    %1261 = vmatprep.subr.mxu0 0.0
    %1262 = vmatpush1.msra.mxu0 0.0
    %1263 = vmatprep.subr.mxu0 0.0
    %1264 = vmatpush1.msra.mxu0 0.0
    %1265 = vmatprep.subr.mxu0 0.0
    %1266 = vmatpush1.msra.mxu0 0.0
    %1267 = vmatprep.subr.mxu0 0.0
    %1268 = vmatpush1.msra.mxu0 0.0
    %1269 = vmatprep.subr.mxu0 0.0
    %1270 = vmatpush1.msra.mxu0 0.0
    %1271 = vmatprep.subr.mxu0 0.0
    %1272 = vmatpush1.msra.mxu0 0.0
    %1273 = vmatprep.subr.mxu0 0.0
    %1274 = vmatpush1.msra.mxu0 0.0
    %1275 = vmatprep.subr.mxu0 0.0
    %1276 = vmatpush1.msra.mxu0 0.0
    %1277 = vmatprep.subr.mxu0 0.0
    %1278 = vmatpush1.msra.mxu0 0.0
    %1279 = vmatprep.subr.mxu0 0.0
    %1280 = vmatpush1.msra.mxu0 0.0
    %1281 = vmatprep.subr.mxu0 0.0
    %1282 = vmatpush1.msra.mxu0 0.0
    %1283 = vmatprep.subr.mxu0 0.0
    %1284 = vmatpush1.msra.mxu0 0.0
    %1285 = vmatprep.subr.mxu0 0.0
    %1286 = vmatpush1.msra.mxu0 0.0
    %1287 = vmatprep.subr.mxu0 0.0
    %1288 = vmatpush1.msra.mxu0 0.0
    %1289 = vmatprep.subr.mxu0 0.0
    %1290 = vmatpush1.msra.mxu0 0.0
    %1291 = vmatprep.subr.mxu0 0.0
    %1292 = vmatpush1.msra.mxu0 0.0
    %1293 = vmatprep.subr.mxu0 0.0
    %1294 = vmatpush1.msra.mxu0 0.0
    %1295 = vmatprep.subr.mxu0 0.0
    %1296 = vmatpush1.msra.mxu0 0.0
    %1297 = vmatprep.subr.mxu0 0.0
    %1298 = vmatpush1.msra.mxu0 0.0
    %1299 = vmatprep.subr.mxu0 0.0
    %1300 = vmatpush1.msra.mxu0 0.0
    %1301 = vmatprep.subr.mxu0 0.0
    %1302 = vmatpush1.msra.mxu0 0.0
    %1303 = vmatprep.mubr.f32.mxu0 0.0
    %1304 = vmatmul.mubr.f32.gmra.mrb[0].mxu0 %v1237
    %v1305 = vpop.f32.mrb[0].mxu0
    %v1306 = vadd.f32 0.0, %v1305
    %v1307 = vpop.f32.mrb[0].mxu0
    %1308 = vdwg.mxu0
    %1309 = vrot.lane.b32.xlu0 %v133, 64
    %v1310 = vpop.permute.xlu0 %1309
    %v1313 = vsel %vm138, %v850, 0
    %1315 = vmatprep.subr.mxu0 0.0
    %1316 = vmatpush1.msra.mxu0 %v1310
    %1317 = vmatprep.subr.mxu0 0.0
    %1318 = vmatpush1.msra.mxu0 0.0
    %1319 = vmatprep.subr.mxu0 0.0
    %1320 = vmatpush1.msra.mxu0 0.0
    %1321 = vmatprep.subr.mxu0 0.0
    %1322 = vmatpush1.msra.mxu0 0.0
    %1323 = vmatprep.subr.mxu0 0.0
    %1324 = vmatpush1.msra.mxu0 0.0
    %1325 = vmatprep.subr.mxu0 0.0
    %1326 = vmatpush1.msra.mxu0 0.0
    %1327 = vmatprep.subr.mxu0 0.0
    %1328 = vmatpush1.msra.mxu0 0.0
    %1329 = vmatprep.subr.mxu0 0.0
    %1330 = vmatpush1.msra.mxu0 0.0
    %1331 = vmatprep.subr.mxu0 0.0
    %1332 = vmatpush1.msra.mxu0 0.0
    %1333 = vmatprep.subr.mxu0 0.0
    %1334 = vmatpush1.msra.mxu0 0.0
    %1335 = vmatprep.subr.mxu0 0.0
    %1336 = vmatpush1.msra.mxu0 0.0
    %1337 = vmatprep.subr.mxu0 0.0
    %1338 = vmatpush1.msra.mxu0 0.0
    %1339 = vmatprep.subr.mxu0 0.0
    %1340 = vmatpush1.msra.mxu0 0.0
    %1341 = vmatprep.subr.mxu0 0.0
    %1342 = vmatpush1.msra.mxu0 0.0
    %1343 = vmatprep.subr.mxu0 0.0
    %1344 = vmatpush1.msra.mxu0 0.0
    %1345 = vmatprep.subr.mxu0 0.0
    %1346 = vmatpush1.msra.mxu0 0.0
    %1347 = vmatprep.subr.mxu0 0.0
    %1348 = vmatpush1.msra.mxu0 0.0
    %1349 = vmatprep.subr.mxu0 0.0
    %1350 = vmatpush1.msra.mxu0 0.0
    %1351 = vmatprep.subr.mxu0 0.0
    %1352 = vmatpush1.msra.mxu0 0.0
    %1353 = vmatprep.subr.mxu0 0.0
    %1354 = vmatpush1.msra.mxu0 0.0
    %1355 = vmatprep.subr.mxu0 0.0
    %1356 = vmatpush1.msra.mxu0 0.0
    %1357 = vmatprep.subr.mxu0 0.0
    %1358 = vmatpush1.msra.mxu0 0.0
    %1359 = vmatprep.subr.mxu0 0.0
    %1360 = vmatpush1.msra.mxu0 0.0
    %1361 = vmatprep.subr.mxu0 0.0
    %1362 = vmatpush1.msra.mxu0 0.0
    %1363 = vmatprep.subr.mxu0 0.0
    %1364 = vmatpush1.msra.mxu0 0.0
    %1365 = vmatprep.subr.mxu0 0.0
    %1366 = vmatpush1.msra.mxu0 0.0
    %1367 = vmatprep.subr.mxu0 0.0
    %1368 = vmatpush1.msra.mxu0 0.0
    %1369 = vmatprep.subr.mxu0 0.0
    %1370 = vmatpush1.msra.mxu0 0.0
    %1371 = vmatprep.subr.mxu0 0.0
    %1372 = vmatpush1.msra.mxu0 0.0
    %1373 = vmatprep.subr.mxu0 0.0
    %1374 = vmatpush1.msra.mxu0 0.0
    %1375 = vmatprep.subr.mxu0 0.0
    %1376 = vmatpush1.msra.mxu0 0.0
    %1377 = vmatprep.subr.mxu0 0.0
    %1378 = vmatpush1.msra.mxu0 0.0
    %1379 = vmatprep.mubr.f32.mxu0 0.0
    %1380 = vmatmul.mubr.f32.gmra.mrb[0].mxu0 %v1313
    %v1381 = vpop.f32.mrb[0].mxu0
    %v1382 = vadd.f32 0.0, %v1381
    %v1383 = vpop.f32.mrb[0].mxu0
    %1384 = vdwg.mxu0
    %1385 = vrot.lane.b32.xlu0 %v135, 64
    %v1386 = vpop.permute.xlu0 %1385
    %v1389 = vsel %vm138, %v852, 0
    %1391 = vmatprep.subr.mxu0 0.0
    %1392 = vmatpush1.msra.mxu0 %v1386
    %1393 = vmatprep.subr.mxu0 0.0
    %1394 = vmatpush1.msra.mxu0 0.0
    %1395 = vmatprep.subr.mxu0 0.0
    %1396 = vmatpush1.msra.mxu0 0.0
    %1397 = vmatprep.subr.mxu0 0.0
    %1398 = vmatpush1.msra.mxu0 0.0
    %1399 = vmatprep.subr.mxu0 0.0
    %1400 = vmatpush1.msra.mxu0 0.0
    %1401 = vmatprep.subr.mxu0 0.0
    %1402 = vmatpush1.msra.mxu0 0.0
    %1403 = vmatprep.subr.mxu0 0.0
    %1404 = vmatpush1.msra.mxu0 0.0
    %1405 = vmatprep.subr.mxu0 0.0
    %1406 = vmatpush1.msra.mxu0 0.0
    %1407 = vmatprep.subr.mxu0 0.0
    %1408 = vmatpush1.msra.mxu0 0.0
    %1409 = vmatprep.subr.mxu0 0.0
    %1410 = vmatpush1.msra.mxu0 0.0
    %1411 = vmatprep.subr.mxu0 0.0
    %1412 = vmatpush1.msra.mxu0 0.0
    %1413 = vmatprep.subr.mxu0 0.0
    %1414 = vmatpush1.msra.mxu0 0.0
    %1415 = vmatprep.subr.mxu0 0.0
    %1416 = vmatpush1.msra.mxu0 0.0
    %1417 = vmatprep.subr.mxu0 0.0
    %1418 = vmatpush1.msra.mxu0 0.0
    %1419 = vmatprep.subr.mxu0 0.0
    %1420 = vmatpush1.msra.mxu0 0.0
    %1421 = vmatprep.subr.mxu0 0.0
    %1422 = vmatpush1.msra.mxu0 0.0
    %1423 = vmatprep.subr.mxu0 0.0
    %1424 = vmatpush1.msra.mxu0 0.0
    %1425 = vmatprep.subr.mxu0 0.0
    %1426 = vmatpush1.msra.mxu0 0.0
    %1427 = vmatprep.subr.mxu0 0.0
    %1428 = vmatpush1.msra.mxu0 0.0
    %1429 = vmatprep.subr.mxu0 0.0
    %1430 = vmatpush1.msra.mxu0 0.0
    %1431 = vmatprep.subr.mxu0 0.0
    %1432 = vmatpush1.msra.mxu0 0.0
    %1433 = vmatprep.subr.mxu0 0.0
    %1434 = vmatpush1.msra.mxu0 0.0
    %1435 = vmatprep.subr.mxu0 0.0
    %1436 = vmatpush1.msra.mxu0 0.0
    %1437 = vmatprep.subr.mxu0 0.0
    %1438 = vmatpush1.msra.mxu0 0.0
    %1439 = vmatprep.subr.mxu0 0.0
    %1440 = vmatpush1.msra.mxu0 0.0
    %1441 = vmatprep.subr.mxu0 0.0
    %1442 = vmatpush1.msra.mxu0 0.0
    %1443 = vmatprep.subr.mxu0 0.0
    %1444 = vmatpush1.msra.mxu0 0.0
    %1445 = vmatprep.subr.mxu0 0.0
    %1446 = vmatpush1.msra.mxu0 0.0
    %1447 = vmatprep.subr.mxu0 0.0
    %1448 = vmatpush1.msra.mxu0 0.0
    %1449 = vmatprep.subr.mxu0 0.0
    %1450 = vmatpush1.msra.mxu0 0.0
    %1451 = vmatprep.subr.mxu0 0.0
    %1452 = vmatpush1.msra.mxu0 0.0
    %1453 = vmatprep.subr.mxu0 0.0
    %1454 = vmatpush1.msra.mxu0 0.0
    %1455 = vmatprep.mubr.f32.mxu0 0.0
    %1456 = vmatmul.mubr.f32.gmra.mrb[0].mxu0 %v1389
    %v1457 = vpop.f32.mrb[0].mxu0
    %v1458 = vadd.f32 0.0, %v1457
    %v1459 = vpop.f32.mrb[0].mxu0
    %1460 = vdwg.mxu0
    %v1461 = vld [vmem:[%s3] sm:$0xff]
    %v1462 = vld [vmem:[%s3 + $0x8] sm:$0xff]
    %v1463 = vld [vmem:[%s3 + $0x10] sm:$0xff]
    %v1464 = vld [vmem:[%s3 + $0x18] sm:$0xff]
    %v1466 = vsel %vm138, %v926, 0
    %v1469 = vsel %vm138, %v1002, 0
    %1471 = vmatprep.subr.mxu0 0.0
    %1472 = vmatpush1.msra.mxu0 %v1461
    %1473 = vmatprep.subr.mxu0 0.0
    %1474 = vmatpush1.msra.mxu0 0.0
    %1475 = vmatprep.subr.mxu0 0.0
    %1476 = vmatpush1.msra.mxu0 0.0
    %1477 = vmatprep.subr.mxu0 0.0
    %1478 = vmatpush1.msra.mxu0 0.0
    %1479 = vmatprep.subr.mxu0 0.0
    %1480 = vmatpush1.msra.mxu0 0.0
    %1481 = vmatprep.subr.mxu0 0.0
    %1482 = vmatpush1.msra.mxu0 0.0
    %1483 = vmatprep.subr.mxu0 0.0
    %1484 = vmatpush1.msra.mxu0 0.0
    %1485 = vmatprep.subr.mxu0 0.0
    %1486 = vmatpush1.msra.mxu0 0.0
    %1487 = vmatprep.subr.mxu0 0.0
    %1488 = vmatpush1.msra.mxu0 0.0
    %1489 = vmatprep.subr.mxu0 0.0
    %1490 = vmatpush1.msra.mxu0 0.0
    %1491 = vmatprep.subr.mxu0 0.0
    %1492 = vmatpush1.msra.mxu0 0.0
    %1493 = vmatprep.subr.mxu0 0.0
    %1494 = vmatpush1.msra.mxu0 0.0
    %1495 = vmatprep.subr.mxu0 0.0
    %1496 = vmatpush1.msra.mxu0 0.0
    %1497 = vmatprep.subr.mxu0 0.0
    %1498 = vmatpush1.msra.mxu0 0.0
    %1499 = vmatprep.subr.mxu0 0.0
    %1500 = vmatpush1.msra.mxu0 0.0
    %1501 = vmatprep.subr.mxu0 0.0
    %1502 = vmatpush1.msra.mxu0 0.0
    %1503 = vmatprep.subr.mxu0 0.0
    %1504 = vmatpush1.msra.mxu0 0.0
    %1505 = vmatprep.subr.mxu0 0.0
    %1506 = vmatpush1.msra.mxu0 0.0
    %1507 = vmatprep.subr.mxu0 0.0
    %1508 = vmatpush1.msra.mxu0 0.0
    %1509 = vmatprep.subr.mxu0 0.0
    %1510 = vmatpush1.msra.mxu0 0.0
    %1511 = vmatprep.subr.mxu0 0.0
    %1512 = vmatpush1.msra.mxu0 0.0
    %1513 = vmatprep.subr.mxu0 0.0
    %1514 = vmatpush1.msra.mxu0 0.0
    %1515 = vmatprep.subr.mxu0 0.0
    %1516 = vmatpush1.msra.mxu0 0.0
    %1517 = vmatprep.subr.mxu0 0.0
    %1518 = vmatpush1.msra.mxu0 0.0
    %1519 = vmatprep.subr.mxu0 0.0
    %1520 = vmatpush1.msra.mxu0 0.0
    %1521 = vmatprep.subr.mxu0 0.0
    %1522 = vmatpush1.msra.mxu0 0.0
    %1523 = vmatprep.subr.mxu0 0.0
    %1524 = vmatpush1.msra.mxu0 0.0
    %1525 = vmatprep.subr.mxu0 0.0
    %1526 = vmatpush1.msra.mxu0 0.0
    %1527 = vmatprep.subr.mxu0 0.0
    %1528 = vmatpush1.msra.mxu0 0.0
    %1529 = vmatprep.subr.mxu0 0.0
    %1530 = vmatpush1.msra.mxu0 0.0
    %1531 = vmatprep.subr.mxu0 0.0
    %1532 = vmatpush1.msra.mxu0 0.0
    %1533 = vmatprep.subr.mxu0 0.0
    %1534 = vmatpush1.msra.mxu0 0.0
    %1535 = vmatprep.mubr.f32.mxu0 0.0
    %1536 = vmatmul.mubr.f32.gmra.mrb[0].mxu0 %v1466
    %v1537 = vpop.f32.mrb[0].mxu0
    %v1538 = vadd.f32 0.0, %v1537
    %v1539 = vpop.f32.mrb[0].mxu0
    %1540 = vmatprep.mubr.f32.mxu0 0.0
    %1541 = vmatmul.mubr.f32.gmra.mrb[0].mxu0 %v1469
    %v1542 = vpop.f32.mrb[0].mxu0
    %v1543 = vadd.f32 0.0, %v1542
    %v1544 = vpop.f32.mrb[0].mxu0
    %1545 = vdwg.mxu0
    %v1547 = vsel %vm138, %v1078, 0
    %v1550 = vsel %vm138, %v1154, 0
    %1552 = vmatprep.subr.mxu0 0.0
    %1553 = vmatpush1.msra.mxu0 %v1462
    %1554 = vmatprep.subr.mxu0 0.0
    %1555 = vmatpush1.msra.mxu0 0.0
    %1556 = vmatprep.subr.mxu0 0.0
    %1557 = vmatpush1.msra.mxu0 0.0
    %1558 = vmatprep.subr.mxu0 0.0
    %1559 = vmatpush1.msra.mxu0 0.0
    %1560 = vmatprep.subr.mxu0 0.0
    %1561 = vmatpush1.msra.mxu0 0.0
    %1562 = vmatprep.subr.mxu0 0.0
    %1563 = vmatpush1.msra.mxu0 0.0
    %1564 = vmatprep.subr.mxu0 0.0
    %1565 = vmatpush1.msra.mxu0 0.0
    %1566 = vmatprep.subr.mxu0 0.0
    %1567 = vmatpush1.msra.mxu0 0.0
    %1568 = vmatprep.subr.mxu0 0.0
    %1569 = vmatpush1.msra.mxu0 0.0
    %1570 = vmatprep.subr.mxu0 0.0
    %1571 = vmatpush1.msra.mxu0 0.0
    %1572 = vmatprep.subr.mxu0 0.0
    %1573 = vmatpush1.msra.mxu0 0.0
    %1574 = vmatprep.subr.mxu0 0.0
    %1575 = vmatpush1.msra.mxu0 0.0
    %1576 = vmatprep.subr.mxu0 0.0
    %1577 = vmatpush1.msra.mxu0 0.0
    %1578 = vmatprep.subr.mxu0 0.0
    %1579 = vmatpush1.msra.mxu0 0.0
    %1580 = vmatprep.subr.mxu0 0.0
    %1581 = vmatpush1.msra.mxu0 0.0
    %1582 = vmatprep.subr.mxu0 0.0
    %1583 = vmatpush1.msra.mxu0 0.0
    %1584 = vmatprep.subr.mxu0 0.0
    %1585 = vmatpush1.msra.mxu0 0.0
    %1586 = vmatprep.subr.mxu0 0.0
    %1587 = vmatpush1.msra.mxu0 0.0
    %1588 = vmatprep.subr.mxu0 0.0
    %1589 = vmatpush1.msra.mxu0 0.0
    %1590 = vmatprep.subr.mxu0 0.0
    %1591 = vmatpush1.msra.mxu0 0.0
    %1592 = vmatprep.subr.mxu0 0.0
    %1593 = vmatpush1.msra.mxu0 0.0
    %1594 = vmatprep.subr.mxu0 0.0
    %1595 = vmatpush1.msra.mxu0 0.0
    %1596 = vmatprep.subr.mxu0 0.0
    %1597 = vmatpush1.msra.mxu0 0.0
    %1598 = vmatprep.subr.mxu0 0.0
    %1599 = vmatpush1.msra.mxu0 0.0
    %1600 = vmatprep.subr.mxu0 0.0
    %1601 = vmatpush1.msra.mxu0 0.0
    %1602 = vmatprep.subr.mxu0 0.0
    %1603 = vmatpush1.msra.mxu0 0.0
    %1604 = vmatprep.subr.mxu0 0.0
    %1605 = vmatpush1.msra.mxu0 0.0
    %1606 = vmatprep.subr.mxu0 0.0
    %1607 = vmatpush1.msra.mxu0 0.0
    %1608 = vmatprep.subr.mxu0 0.0
    %1609 = vmatpush1.msra.mxu0 0.0
    %1610 = vmatprep.subr.mxu0 0.0
    %1611 = vmatpush1.msra.mxu0 0.0
    %1612 = vmatprep.subr.mxu0 0.0
    %1613 = vmatpush1.msra.mxu0 0.0
    %1614 = vmatprep.subr.mxu0 0.0
    %1615 = vmatpush1.msra.mxu0 0.0
    %1616 = vmatprep.mubr.f32.mxu0 0.0
    %1617 = vmatmul.mubr.f32.gmra.mrb[0].mxu0 %v1547
    %v1618 = vpop.f32.mrb[0].mxu0
    %v1619 = vadd.f32 0.0, %v1618
    %v1620 = vpop.f32.mrb[0].mxu0
    %1621 = vmatprep.mubr.f32.mxu0 0.0
    %1622 = vmatmul.mubr.f32.gmra.mrb[0].mxu0 %v1550
    %v1623 = vpop.f32.mrb[0].mxu0
    %v1624 = vadd.f32 0.0, %v1623
    %v1625 = vpop.f32.mrb[0].mxu0
    %1626 = vdwg.mxu0
    %v1628 = vsel %vm138, %v1230, 0
    %v1631 = vsel %vm138, %v1306, 0
    %1633 = vmatprep.subr.mxu0 0.0
    %1634 = vmatpush1.msra.mxu0 %v1463
    %1635 = vmatprep.subr.mxu0 0.0
    %1636 = vmatpush1.msra.mxu0 0.0
    %1637 = vmatprep.subr.mxu0 0.0
    %1638 = vmatpush1.msra.mxu0 0.0
    %1639 = vmatprep.subr.mxu0 0.0
    %1640 = vmatpush1.msra.mxu0 0.0
    %1641 = vmatprep.subr.mxu0 0.0
    %1642 = vmatpush1.msra.mxu0 0.0
    %1643 = vmatprep.subr.mxu0 0.0
    %1644 = vmatpush1.msra.mxu0 0.0
    %1645 = vmatprep.subr.mxu0 0.0
    %1646 = vmatpush1.msra.mxu0 0.0
    %1647 = vmatprep.subr.mxu0 0.0
    %1648 = vmatpush1.msra.mxu0 0.0
    %1649 = vmatprep.subr.mxu0 0.0
    %1650 = vmatpush1.msra.mxu0 0.0
    %1651 = vmatprep.subr.mxu0 0.0
    %1652 = vmatpush1.msra.mxu0 0.0
    %1653 = vmatprep.subr.mxu0 0.0
    %1654 = vmatpush1.msra.mxu0 0.0
    %1655 = vmatprep.subr.mxu0 0.0
    %1656 = vmatpush1.msra.mxu0 0.0
    %1657 = vmatprep.subr.mxu0 0.0
    %1658 = vmatpush1.msra.mxu0 0.0
    %1659 = vmatprep.subr.mxu0 0.0
    %1660 = vmatpush1.msra.mxu0 0.0
    %1661 = vmatprep.subr.mxu0 0.0
    %1662 = vmatpush1.msra.mxu0 0.0
    %1663 = vmatprep.subr.mxu0 0.0
    %1664 = vmatpush1.msra.mxu0 0.0
    %1665 = vmatprep.subr.mxu0 0.0
    %1666 = vmatpush1.msra.mxu0 0.0
    %1667 = vmatprep.subr.mxu0 0.0
    %1668 = vmatpush1.msra.mxu0 0.0
    %1669 = vmatprep.subr.mxu0 0.0
    %1670 = vmatpush1.msra.mxu0 0.0
    %1671 = vmatprep.subr.mxu0 0.0
    %1672 = vmatpush1.msra.mxu0 0.0
    %1673 = vmatprep.subr.mxu0 0.0
    %1674 = vmatpush1.msra.mxu0 0.0
    %1675 = vmatprep.subr.mxu0 0.0
    %1676 = vmatpush1.msra.mxu0 0.0
    %1677 = vmatprep.subr.mxu0 0.0
    %1678 = vmatpush1.msra.mxu0 0.0
    %1679 = vmatprep.subr.mxu0 0.0
    %1680 = vmatpush1.msra.mxu0 0.0
    %1681 = vmatprep.subr.mxu0 0.0
    %1682 = vmatpush1.msra.mxu0 0.0
    %1683 = vmatprep.subr.mxu0 0.0
    %1684 = vmatpush1.msra.mxu0 0.0
    %1685 = vmatprep.subr.mxu0 0.0
    %1686 = vmatpush1.msra.mxu0 0.0
    %1687 = vmatprep.subr.mxu0 0.0
    %1688 = vmatpush1.msra.mxu0 0.0
    %1689 = vmatprep.subr.mxu0 0.0
    %1690 = vmatpush1.msra.mxu0 0.0
    %1691 = vmatprep.subr.mxu0 0.0
    %1692 = vmatpush1.msra.mxu0 0.0
    %1693 = vmatprep.subr.mxu0 0.0
    %1694 = vmatpush1.msra.mxu0 0.0
    %1695 = vmatprep.subr.mxu0 0.0
    %1696 = vmatpush1.msra.mxu0 0.0
    %1697 = vmatprep.mubr.f32.mxu0 0.0
    %1698 = vmatmul.mubr.f32.gmra.mrb[0].mxu0 %v1628
    %v1699 = vpop.f32.mrb[0].mxu0
    %v1700 = vadd.f32 0.0, %v1699
    %v1701 = vpop.f32.mrb[0].mxu0
    %1702 = vmatprep.mubr.f32.mxu0 0.0
    %1703 = vmatmul.mubr.f32.gmra.mrb[0].mxu0 %v1631
    %v1704 = vpop.f32.mrb[0].mxu0
    %v1705 = vadd.f32 0.0, %v1704
    %v1706 = vpop.f32.mrb[0].mxu0
    %1707 = vdwg.mxu0
    %v1709 = vsel %vm138, %v1382, 0
    %v1712 = vsel %vm138, %v1458, 0
    %1714 = vmatprep.subr.mxu0 0.0
    %1715 = vmatpush1.msra.mxu0 %v1464
    %1716 = vmatprep.subr.mxu0 0.0
    %1717 = vmatpush1.msra.mxu0 0.0
    %1718 = vmatprep.subr.mxu0 0.0
    %1719 = vmatpush1.msra.mxu0 0.0
    %1720 = vmatprep.subr.mxu0 0.0
    %1721 = vmatpush1.msra.mxu0 0.0
    %1722 = vmatprep.subr.mxu0 0.0
    %1723 = vmatpush1.msra.mxu0 0.0
    %1724 = vmatprep.subr.mxu0 0.0
    %1725 = vmatpush1.msra.mxu0 0.0
    %1726 = vmatprep.subr.mxu0 0.0
    %1727 = vmatpush1.msra.mxu0 0.0
    %1728 = vmatprep.subr.mxu0 0.0
    %1729 = vmatpush1.msra.mxu0 0.0
    %1730 = vmatprep.subr.mxu0 0.0
    %1731 = vmatpush1.msra.mxu0 0.0
    %1732 = vmatprep.subr.mxu0 0.0
    %1733 = vmatpush1.msra.mxu0 0.0
    %1734 = vmatprep.subr.mxu0 0.0
    %1735 = vmatpush1.msra.mxu0 0.0
    %1736 = vmatprep.subr.mxu0 0.0
    %1737 = vmatpush1.msra.mxu0 0.0
    %1738 = vmatprep.subr.mxu0 0.0
    %1739 = vmatpush1.msra.mxu0 0.0
    %1740 = vmatprep.subr.mxu0 0.0
    %1741 = vmatpush1.msra.mxu0 0.0
    %1742 = vmatprep.subr.mxu0 0.0
    %1743 = vmatpush1.msra.mxu0 0.0
    %1744 = vmatprep.subr.mxu0 0.0
    %1745 = vmatpush1.msra.mxu0 0.0
    %1746 = vmatprep.subr.mxu0 0.0
    %1747 = vmatpush1.msra.mxu0 0.0
    %1748 = vmatprep.subr.mxu0 0.0
    %1749 = vmatpush1.msra.mxu0 0.0
    %1750 = vmatprep.subr.mxu0 0.0
    %1751 = vmatpush1.msra.mxu0 0.0
    %1752 = vmatprep.subr.mxu0 0.0
    %1753 = vmatpush1.msra.mxu0 0.0
    %1754 = vmatprep.subr.mxu0 0.0
    %1755 = vmatpush1.msra.mxu0 0.0
    %1756 = vmatprep.subr.mxu0 0.0
    %1757 = vmatpush1.msra.mxu0 0.0
    %1758 = vmatprep.subr.mxu0 0.0
    %1759 = vmatpush1.msra.mxu0 0.0
    %1760 = vmatprep.subr.mxu0 0.0
    %1761 = vmatpush1.msra.mxu0 0.0
    %1762 = vmatprep.subr.mxu0 0.0
    %1763 = vmatpush1.msra.mxu0 0.0
    %1764 = vmatprep.subr.mxu0 0.0
    %1765 = vmatpush1.msra.mxu0 0.0
    %1766 = vmatprep.subr.mxu0 0.0
    %1767 = vmatpush1.msra.mxu0 0.0
    %1768 = vmatprep.subr.mxu0 0.0
    %1769 = vmatpush1.msra.mxu0 0.0
    %1770 = vmatprep.subr.mxu0 0.0
    %1771 = vmatpush1.msra.mxu0 0.0
    %1772 = vmatprep.subr.mxu0 0.0
    %1773 = vmatpush1.msra.mxu0 0.0
    %1774 = vmatprep.subr.mxu0 0.0
    %1775 = vmatpush1.msra.mxu0 0.0
    %1776 = vmatprep.subr.mxu0 0.0
    %1777 = vmatpush1.msra.mxu0 0.0
    %1778 = vmatprep.mubr.f32.mxu0 0.0
    %1779 = vmatmul.mubr.f32.gmra.mrb[0].mxu0 %v1709
    %v1780 = vpop.f32.mrb[0].mxu0
    %v1781 = vadd.f32 0.0, %v1780
    %v1782 = vpop.f32.mrb[0].mxu0
    %1783 = vmatprep.mubr.f32.mxu0 0.0
    %1784 = vmatmul.mubr.f32.gmra.mrb[0].mxu0 %v1712
    %v1785 = vpop.f32.mrb[0].mxu0
    %v1786 = vadd.f32 0.0, %v1785
    %v1787 = vpop.f32.mrb[0].mxu0
    %1788 = vdwg.mxu0
    %v1789 = vsel %vm40, %v1538, 0.0
    %v1790 = vsel %vm40, %v1619, 0.0
    %v1791 = vadd.f32 %v1789, %v1790
    %v1792 = vsel %vm40, %v1700, 0.0
    %v1793 = vadd.f32 %v1791, %v1792
    %v1794 = vsel %vm40, %v1781, 0.0
    %v1795 = vadd.f32 %v1793, %v1794
    %v1796 = vsel %vm40, %v1543, 0.0
    %v1797 = vsel %vm40, %v1624, 0.0
    %v1798 = vadd.f32 %v1796, %v1797
    %v1799 = vsel %vm40, %v1705, 0.0
    %v1800 = vadd.f32 %v1798, %v1799
    %v1801 = vsel %vm40, %v1786, 0.0
    %v1802 = vadd.f32 %v1800, %v1801
    %v1803 = vlaneseq
    %v1804 = vshrl.u32 %v1803, 7
    %v1805 = vsub.s32 1, %v1804
    %v1806 = vrot.slane %v31, %v1805
    %v1807 = vadd.f32 %v1795, %v1806
    %v1808 = vadd.f32 %v1802, %v1806
    %v1809 = vadd.f32 %v1807, %v27
    %v1810 = vadd.f32 %v1808, %v28
    %v1811 = vsel %vm40, %v1809, 0.0
    %1812 = vadd.xlane.f32.xlu0 %v1811
    %v1813 = vpop.xlane.xlu0 %1812
    %v1814 = vsel %vm40, %v1810, 0.0
    %1815 = vadd.xlane.f32.xlu0 %v1814
    %v1816 = vpop.xlane.xlu0 %1815
    %v1817 = vrcp.pop 32.0
    %v1818 = vmul.f32 %v1813, %v1817
    %v1819 = vmul.f32 %v1816, %v1817
    %v1820 = vsub.f32 %v1809, %v1818
    %v1821 = vsub.f32 %v1810, %v1819
    %v1822 = vmul.f32 %v1820, %v1820
    %v1823 = vmul.f32 %v1821, %v1821
    %v1824 = vsel %vm40, %v1822, 0.0
    %1825 = vadd.xlane.f32.xlu0 %v1824
    %v1826 = vpop.xlane.xlu0 %1825
    %v1827 = vsel %vm40, %v1823, 0.0
    %1828 = vadd.xlane.f32.xlu0 %v1827
    %v1829 = vpop.xlane.xlu0 %1828
    %v1830 = vmul.f32 %v1826, %v1817
    %v1831 = vmul.f32 %v1829, %v1817
    %v1832 = vadd.f32 %v1830, 1e-12
    %v1833 = vadd.f32 %v1831, 1e-12
    %v1834 = vrsqrt.pop %v1832
    %v1835 = vrsqrt.pop %v1833
    %v1836 = vmul.f32 %v1820, %v1834
    %v1837 = vmul.f32 %v1821, %v1835
    %v1838 = vlaneseq
    %v1839 = vshrl.u32 %v1838, 7
    %v1840 = vsub.s32 2, %v1839
    %v1841 = vrot.slane %v31, %v1840
    %v1842 = vmul.f32 %v1836, %v1841
    %v1843 = vmul.f32 %v1837, %v1841
    %v1844 = vlaneseq
    %v1845 = vshrl.u32 %v1844, 7
    %v1846 = vsub.s32 3, %v1845
    %v1847 = vrot.slane %v31, %v1846
    %v1848 = vadd.f32 %v1842, %v1847
    %v1849 = vadd.f32 %v1843, %v1847
    %v1850 = vld [vmem:[%s4] sm:$0xff]
    %v1851 = vld [vmem:[%s4 + $0x8] sm:$0xff]
    %v1852 = vld [vmem:[%s4 + $0x10] sm:$0xff]
    %v1853 = vld [vmem:[%s4 + $0x18] sm:$0xff]
    %v1854 = vlaneseq
    %v1855 = vshrl.u32 %v1854, 7
    %v1856 = vsub.s32 4, %v1855
    %v1857 = vrot.slane %v31, %v1856
    %v1859 = vsel %vm40, %v1848, 0
    %v1862 = vsel %vm40, %v1849, 0
    %1864 = vmatprep.subr.mxu0 0.0
    %1865 = vmatpush1.msra.mxu0 %v1850
    %1866 = vmatprep.subr.mxu0 0.0
    %1867 = vmatpush1.msra.mxu0 %v1851
    %1868 = vmatprep.subr.mxu0 0.0
    %1869 = vmatpush1.msra.mxu0 %v1852
    %1870 = vmatprep.subr.mxu0 0.0
    %1871 = vmatpush1.msra.mxu0 %v1853
    %1872 = vmatprep.subr.mxu0 0.0
    %1873 = vmatpush1.msra.mxu0 0.0
    %1874 = vmatprep.subr.mxu0 0.0
    %1875 = vmatpush1.msra.mxu0 0.0
    %1876 = vmatprep.subr.mxu0 0.0
    %1877 = vmatpush1.msra.mxu0 0.0
    %1878 = vmatprep.subr.mxu0 0.0
    %1879 = vmatpush1.msra.mxu0 0.0
    %1880 = vmatprep.subr.mxu0 0.0
    %1881 = vmatpush1.msra.mxu0 0.0
    %1882 = vmatprep.subr.mxu0 0.0
    %1883 = vmatpush1.msra.mxu0 0.0
    %1884 = vmatprep.subr.mxu0 0.0
    %1885 = vmatpush1.msra.mxu0 0.0
    %1886 = vmatprep.subr.mxu0 0.0
    %1887 = vmatpush1.msra.mxu0 0.0
    %1888 = vmatprep.subr.mxu0 0.0
    %1889 = vmatpush1.msra.mxu0 0.0
    %1890 = vmatprep.subr.mxu0 0.0
    %1891 = vmatpush1.msra.mxu0 0.0
    %1892 = vmatprep.subr.mxu0 0.0
    %1893 = vmatpush1.msra.mxu0 0.0
    %1894 = vmatprep.subr.mxu0 0.0
    %1895 = vmatpush1.msra.mxu0 0.0
    %1896 = vmatprep.subr.mxu0 0.0
    %1897 = vmatpush1.msra.mxu0 0.0
    %1898 = vmatprep.subr.mxu0 0.0
    %1899 = vmatpush1.msra.mxu0 0.0
    %1900 = vmatprep.subr.mxu0 0.0
    %1901 = vmatpush1.msra.mxu0 0.0
    %1902 = vmatprep.subr.mxu0 0.0
    %1903 = vmatpush1.msra.mxu0 0.0
    %1904 = vmatprep.subr.mxu0 0.0
    %1905 = vmatpush1.msra.mxu0 0.0
    %1906 = vmatprep.subr.mxu0 0.0
    %1907 = vmatpush1.msra.mxu0 0.0
    %1908 = vmatprep.subr.mxu0 0.0
    %1909 = vmatpush1.msra.mxu0 0.0
    %1910 = vmatprep.subr.mxu0 0.0
    %1911 = vmatpush1.msra.mxu0 0.0
    %1912 = vmatprep.subr.mxu0 0.0
    %1913 = vmatpush1.msra.mxu0 0.0
    %1914 = vmatprep.subr.mxu0 0.0
    %1915 = vmatpush1.msra.mxu0 0.0
    %1916 = vmatprep.subr.mxu0 0.0
    %1917 = vmatpush1.msra.mxu0 0.0
    %1918 = vmatprep.subr.mxu0 0.0
    %1919 = vmatpush1.msra.mxu0 0.0
    %1920 = vmatprep.subr.mxu0 0.0
    %1921 = vmatpush1.msra.mxu0 0.0
    %1922 = vmatprep.subr.mxu0 0.0
    %1923 = vmatpush1.msra.mxu0 0.0
    %1924 = vmatprep.subr.mxu0 0.0
    %1925 = vmatpush1.msra.mxu0 0.0
    %1926 = vmatprep.subr.mxu0 0.0
    %1927 = vmatpush1.msra.mxu0 0.0
    %1928 = vmatprep.mubr.f32.mxu0 0.0
    %1929 = vmatmul.mubr.f32.gmra.mrb[0].mxu0 %v1859
    %v1930 = vpop.f32.mrb[0].mxu0
    %v1931 = vadd.f32 %v1857, %v1930
    %v1932 = vpop.f32.mrb[0].mxu0
    %1933 = vmatprep.mubr.f32.mxu0 0.0
    %1934 = vmatmul.mubr.f32.gmra.mrb[0].mxu0 %v1862
    %v1935 = vpop.f32.mrb[0].mxu0
    %v1936 = vadd.f32 %v1857, %v1935
    %v1937 = vpop.f32.mrb[0].mxu0
    %1938 = vdwg.mxu0
    %v1939 = vmul.f32 %v1931, 0.5
    %v1940 = vmul.f32 %v1936, 0.5
    %v1941 = vmul.f32 %v1931, 0.70710677
    %v1942 = vmul.f32 %v1936, 0.70710677
    %v1943 = verf.f32.pop %v1941
    %v1944 = verf.f32.pop %v1942
    %v1945 = vadd.f32 %v1943, 1.0
    %v1946 = vadd.f32 %v1944, 1.0
    %v1947 = vmul.f32 %v1939, %v1945
    %v1948 = vmul.f32 %v1940, %v1946
    %v1949 = vld [vmem:[%s5] sm:$0xff]
    %v1950 = vld [vmem:[%s5 + $0x8] sm:$0xff]
    %v1951 = vld [vmem:[%s5 + $0x10] sm:$0xff]
    %v1952 = vld [vmem:[%s5 + $0x18] sm:$0xff]
    %v1953 = vld [vmem:[%s5 + $0x20] sm:$0xff]
    %v1954 = vld [vmem:[%s5 + $0x28] sm:$0xff]
    %v1955 = vld [vmem:[%s5 + $0x30] sm:$0xff]
    %v1956 = vld [vmem:[%s5 + $0x38] sm:$0xff]
    %v1957 = vld [vmem:[%s5 + $0x40] sm:$0xff]
    %v1958 = vld [vmem:[%s5 + $0x48] sm:$0xff]
    %v1959 = vld [vmem:[%s5 + $0x50] sm:$0xff]
    %v1960 = vld [vmem:[%s5 + $0x58] sm:$0xff]
    %v1961 = vld [vmem:[%s5 + $0x60] sm:$0xff]
    %v1962 = vld [vmem:[%s5 + $0x68] sm:$0xff]
    %v1963 = vld [vmem:[%s5 + $0x70] sm:$0xff]
    %v1964 = vld [vmem:[%s5 + $0x78] sm:$0xff]
    %v1965 = vlaneseq
    %v1966 = vshrl.u32 %v1965, 7
    %v1967 = vsub.s32 5, %v1966
    %v1968 = vrot.slane %v31, %v1967
    %1969 = vmatprep.subr.mxu0 0.0
    %1970 = vmatpush1.msra.mxu0 %v1949
    %1971 = vmatprep.subr.mxu0 0.0
    %1972 = vmatpush1.msra.mxu0 %v1950
    %1973 = vmatprep.subr.mxu0 0.0
    %1974 = vmatpush1.msra.mxu0 %v1951
    %1975 = vmatprep.subr.mxu0 0.0
    %1976 = vmatpush1.msra.mxu0 %v1952
    %1977 = vmatprep.subr.mxu0 0.0
    %1978 = vmatpush1.msra.mxu0 %v1953
    %1979 = vmatprep.subr.mxu0 0.0
    %1980 = vmatpush1.msra.mxu0 %v1954
    %1981 = vmatprep.subr.mxu0 0.0
    %1982 = vmatpush1.msra.mxu0 %v1955
    %1983 = vmatprep.subr.mxu0 0.0
    %1984 = vmatpush1.msra.mxu0 %v1956
    %1985 = vmatprep.subr.mxu0 0.0
    %1986 = vmatpush1.msra.mxu0 %v1957
    %1987 = vmatprep.subr.mxu0 0.0
    %1988 = vmatpush1.msra.mxu0 %v1958
    %1989 = vmatprep.subr.mxu0 0.0
    %1990 = vmatpush1.msra.mxu0 %v1959
    %1991 = vmatprep.subr.mxu0 0.0
    %1992 = vmatpush1.msra.mxu0 %v1960
    %1993 = vmatprep.subr.mxu0 0.0
    %1994 = vmatpush1.msra.mxu0 %v1961
    %1995 = vmatprep.subr.mxu0 0.0
    %1996 = vmatpush1.msra.mxu0 %v1962
    %1997 = vmatprep.subr.mxu0 0.0
    %1998 = vmatpush1.msra.mxu0 %v1963
    %1999 = vmatprep.subr.mxu0 0.0
    %2000 = vmatpush1.msra.mxu0 %v1964
    %2001 = vmatprep.subr.mxu0 0.0
    %2002 = vmatpush1.msra.mxu0 0.0
    %2003 = vmatprep.subr.mxu0 0.0
    %2004 = vmatpush1.msra.mxu0 0.0
    %2005 = vmatprep.subr.mxu0 0.0
    %2006 = vmatpush1.msra.mxu0 0.0
    %2007 = vmatprep.subr.mxu0 0.0
    %2008 = vmatpush1.msra.mxu0 0.0
    %2009 = vmatprep.subr.mxu0 0.0
    %2010 = vmatpush1.msra.mxu0 0.0
    %2011 = vmatprep.subr.mxu0 0.0
    %2012 = vmatpush1.msra.mxu0 0.0
    %2013 = vmatprep.subr.mxu0 0.0
    %2014 = vmatpush1.msra.mxu0 0.0
    %2015 = vmatprep.subr.mxu0 0.0
    %2016 = vmatpush1.msra.mxu0 0.0
    %2017 = vmatprep.subr.mxu0 0.0
    %2018 = vmatpush1.msra.mxu0 0.0
    %2019 = vmatprep.subr.mxu0 0.0
    %2020 = vmatpush1.msra.mxu0 0.0
    %2021 = vmatprep.subr.mxu0 0.0
    %2022 = vmatpush1.msra.mxu0 0.0
    %2023 = vmatprep.subr.mxu0 0.0
    %2024 = vmatpush1.msra.mxu0 0.0
    %2025 = vmatprep.subr.mxu0 0.0
    %2026 = vmatpush1.msra.mxu0 0.0
    %2027 = vmatprep.subr.mxu0 0.0
    %2028 = vmatpush1.msra.mxu0 0.0
    %2029 = vmatprep.subr.mxu0 0.0
    %2030 = vmatpush1.msra.mxu0 0.0
    %2031 = vmatprep.subr.mxu0 0.0
    %2032 = vmatpush1.msra.mxu0 0.0
    %2033 = vmatprep.mubr.f32.mxu0 0.0
    %2034 = vmatmul.mubr.f32.gmra.mrb[0].mxu0 %v1947
    %v2035 = vpop.f32.mrb[0].mxu0
    %v2036 = vadd.f32 %v1968, %v2035
    %v2037 = vpop.f32.mrb[0].mxu0
    %2038 = vmatprep.mubr.f32.mxu0 0.0
    %2039 = vmatmul.mubr.f32.gmra.mrb[0].mxu0 %v1948
    %v2040 = vpop.f32.mrb[0].mxu0
    %v2041 = vadd.f32 %v1968, %v2040
    %v2042 = vpop.f32.mrb[0].mxu0
    %2043 = vdwg.mxu0
    %v2044 = vadd.f32 %v2036, %v1848
    %v2045 = vadd.f32 %v2041, %v1849
    %v2046 = vsel %vm40, %v2044, 0.0
    %2047 = vadd.xlane.f32.xlu0 %v2046
    %v2048 = vpop.xlane.xlu0 %2047
    %v2049 = vsel %vm40, %v2045, 0.0
    %2050 = vadd.xlane.f32.xlu0 %v2049
    %v2051 = vpop.xlane.xlu0 %2050
    %v2052 = vmul.f32 %v2048, %v1817
    %v2053 = vmul.f32 %v2051, %v1817
    %v2054 = vsub.f32 %v2044, %v2052
    %v2055 = vsub.f32 %v2045, %v2053
    %v2056 = vmul.f32 %v2054, %v2054
    %v2057 = vmul.f32 %v2055, %v2055
    %v2058 = vsel %vm40, %v2056, 0.0
    %2059 = vadd.xlane.f32.xlu0 %v2058
    %v2060 = vpop.xlane.xlu0 %2059
    %v2061 = vsel %vm40, %v2057, 0.0
    %2062 = vadd.xlane.f32.xlu0 %v2061
    %v2063 = vpop.xlane.xlu0 %2062
    %v2064 = vmul.f32 %v2060, %v1817
    %v2065 = vmul.f32 %v2063, %v1817
    %v2066 = vadd.f32 %v2064, 1e-12
    %v2067 = vadd.f32 %v2065, 1e-12
    %v2068 = vrsqrt.pop %v2066
    %v2069 = vrsqrt.pop %v2067
    %v2070 = vmul.f32 %v2054, %v2068
    %v2071 = vmul.f32 %v2055, %v2069
    %v2072 = vlaneseq
    %v2073 = vshrl.u32 %v2072, 7
    %v2074 = vsub.s32 6, %v2073
    %v2075 = vrot.slane %v31, %v2074
    %v2076 = vmul.f32 %v2070, %v2075
    %v2077 = vmul.f32 %v2071, %v2075
    %v2078 = vlaneseq
    %v2079 = vshrl.u32 %v2078, 7
    %v2080 = vsub.s32 7, %v2079
    %v2081 = vrot.slane %v31, %v2080
    %v2082 = vadd.f32 %v2076, %v2081
    %v2083 = vadd.f32 %v2077, %v2081
    %2084 = vst.msk [vmem:[#allocation2] sm:$0xff] %vm40, %v2082
    %2085 = vst.msk [vmem:[#allocation2 + $0x8] sm:$0xff] %vm40, %v2083
    // Predicated region
    $region30: #{tpu_custom_call.1} parent=1 // pred_check
      _
    $region31: #{tpu_custom_call.1} parent=1 // pred_check_branch
      %2087 = sbr.rel (0) target = $region33
    $region32: #{tpu_custom_call.1} parent=1 // pred_region
      %s2089 = ssub.s32 256, 256
      %2090 = vsyncadd [#allocation3], %s2089
      %s2091 = sshll.u32 [#allocation2], 4
      %s2092 = int_to_ptr.vmem [resolvable:$true] %s2091
      %2097 = dma.vmem_to_hbm [thread:$0]  %s2092, 256, %s7, [#allocation3], 128, 128, 8
    $region33: #{tpu_custom_call.1} parent=1 // pred_fallthru
      _
    // Predicated region
    $region34: #{tpu_custom_call.1} parent=1 // pred_check
      _
    $region35: #{tpu_custom_call.1} parent=1 // pred_check_branch
      %2099 = sbr.rel (0) target = $region37
    $region36: #{tpu_custom_call.1} parent=1 // pred_region
      %2100 = dma.done [#allocation3], 256
    $region37: #{tpu_custom_call.1} parent=1 // pred_fallthru
      _
    %2101 = vsyncpa [#allocation3], 1

</llo_original>
